<compile_context>
chip_gen: v7x
topology: tpu7x:2x2x1
jax: 0.10.0
libtpu: 0.0.40
codegen_flags: <defaults>
</compile_context>

<pallas_src>
import functools

import jax
import jax.numpy as jnp
import numpy as np
from jax.experimental import pallas as pl
from jax.experimental.pallas import tpu as pltpu

BN_EPS = 1e-5


# -----------------------------------------------------------------------------
# Fused kernel: stems + base conv + avg pool + bottleneck BN + classifier
# -----------------------------------------------------------------------------
def _fused_embed_kernel(x_ref, w_stem_ref, b_stem_ref, w_base_ref, b_base_ref,
                        gamma_ref, beta_ref, wc_ref, pool_ref, logits_ref,
                        acc_ref, *, inv_hw, num_modalities, batch_per_modality):
    """Grid = (modality, HW // t_hw).

    x_ref        : (B, t_hw, Cin)  one spatial row-tile of the whole batch of
                                   one modality (channels-last).
    pool_ref     : (M*B, cout)     resident across the whole grid (constant
                                   index map) -> readable by the head.
    logits_ref   : (M*B, class_num)
    acc_ref      : (B, cout)       per-modality partial spatial sums.
    """
    m = pl.program_id(0)
    k = pl.program_id(1)
    nk = pl.num_programs(1)
    B = batch_per_modality

    w1 = w_stem_ref[...]                  # (Cin, cmid)  pre-transposed
    b1 = b_stem_ref[...]                  # (1, cmid)
    wb = w_base_ref[...]                  # (cmid, cout) pre-transposed
    bb = b_base_ref[...]                  # (1, cout)
    cin = w1.shape[0]

    # Per-sample compute as a static loop (B is compile-time, tiny); all ops
    # stay 2D which keeps Mosaic lowering simple and layouts tile-aligned.
    per_sample_sums = []
    for bi in range(B):
        xb = x_ref[bi]                    # (t_hw, Cin)   Cin is tiny (3)

        # Stem 1x1 conv over Cin=3: plain VPU fused multiply-adds -- a K=3
        # MXU matmul would waste the whole systolic array.
        y = xb[:, 0:1] * w1[0:1, :]
        for c in range(1, cin):           # static loop, Cin is compile-time
            y = y + xb[:, c:c + 1] * w1[c:c + 1, :]
        y = jnp.maximum(y + b1, 0.0)      # (t_hw, cmid)

        # Base 1x1 conv: K=cmid matmul on the MXU (f32 accumulation).
        g = jnp.dot(y, wb, preferred_element_type=jnp.float32)
        g = jnp.maximum(g + bb, 0.0)      # (t_hw, cout)

        # Partial adaptive_avg_pool2d(., 1): spatial sum of this tile.
        per_sample_sums.append(jnp.sum(g, axis=0, keepdims=True))   # (1, cout)

    tile_sum = jnp.concatenate(per_sample_sums, axis=0)             # (B, cout)

    @pl.when(k == 0)
    def _():
        acc_ref[...] = tile_sum

    @pl.when(k != 0)
    def _():
        acc_ref[...] = acc_ref[...] + tile_sum

    # Finished this modality's spatial extent: write its pooled rows into the
    # resident (M*B, cout) output block.  num_modalities <= 2, so unroll the
    # modality branch statically -> fully static stores.
    @pl.when(k == nk - 1)
    def _():
        pooled = acc_ref[...] * inv_hw                                # (B, cout)
        for mi in range(num_modalities):
            @pl.when(m == mi)
            def _(pooled=pooled, mi=mi):
                pool_ref[mi * B:(mi + 1) * B, :] = pooled

    # Final grid step: all modalities pooled -> bottleneck BatchNorm1d
    # (training batch statistics, biased variance, frozen bias path handled
    # by beta) + classifier Linear(pool_dim, class_num, bias=False).
    @pl.when((m == num_modalities - 1) & (k == nk - 1))
    def _():
        xp = pool_ref[...]                                            # (N, cout)
        mu = jnp.mean(xp, axis=0, keepdims=True)
        var = jnp.mean((xp - mu) ** 2, axis=0, keepdims=True)         # biased
        feat = (xp - mu) * jax.lax.rsqrt(var + BN_EPS)
        feat = feat * gamma_ref[...] + beta_ref[...]
        logits_ref[...] = jnp.dot(feat, wc_ref[...],
                                  preferred_element_type=jnp.float32)


def _pick_hw_tile(hw, max_tile=512):
    for t in (max_tile, 256, 128, 64, 32, 16, 8):
        if t <= hw and hw % t == 0:
            return t
    return hw   # fall back to the full spatial extent (still a valid block)


def fused_embed_forward(x_cl, w_stem, b_stem, w_base_t, b_base, gamma, beta,
                        wc_t, *, max_tile=512):
    """x_cl: (M, B, HW, Cin); w_stem: (M, Cin, cmid); b_stem: (M, 1, cmid);
    w_base_t: (cmid, cout); b_base/gamma/beta: (1, cout); wc_t: (cout, K).
    Returns (x_pool (M*B, cout), logits (M*B, K))."""
    M, B, HW, Cin = x_cl.shape
    cmid = w_stem.shape[2]
    cout = w_base_t.shape[1]
    class_num = wc_t.shape[1]
    t_hw = _pick_hw_tile(HW, max_tile)
    nk = HW // t_hw
    N = M * B

    kernel = functools.partial(_fused_embed_kernel, inv_hw=1.0 / HW,
                               num_modalities=M, batch_per_modality=B)

    return pl.pallas_call(
        kernel,
        out_shape=(jax.ShapeDtypeStruct((N, cout), jnp.float32),
                   jax.ShapeDtypeStruct((N, class_num), jnp.float32)),
        grid_spec=pltpu.PrefetchScalarGridSpec(
            num_scalar_prefetch=0,
            grid=(M, nk),
            in_specs=[
                pl.BlockSpec((None, B, t_hw, Cin), lambda m, k: (m, 0, k, 0)),
                pl.BlockSpec((None, Cin, cmid), lambda m, k: (m, 0, 0)),
                pl.BlockSpec((None, 1, cmid), lambda m, k: (m, 0, 0)),
                pl.BlockSpec((cmid, cout), lambda m, k: (0, 0)),
                pl.BlockSpec((1, cout), lambda m, k: (0, 0)),
                pl.BlockSpec((1, cout), lambda m, k: (0, 0)),
                pl.BlockSpec((1, cout), lambda m, k: (0, 0)),
                pl.BlockSpec((cout, class_num), lambda m, k: (0, 0)),
            ],
            out_specs=(
                # constant index maps -> outputs stay resident in VMEM across
                # the whole grid (accumulator / head-readable pattern).
                pl.BlockSpec((N, cout), lambda m, k: (0, 0)),
                pl.BlockSpec((N, class_num), lambda m, k: (0, 0)),
            ),
            scratch_shapes=[pltpu.VMEM((B, cout), jnp.float32)],
        ),
        compiler_params=pltpu.CompilerParams(
            # both axes revisit the resident output blocks and the final BN
            # couples all modalities -> sequential ("arbitrary") on both.
            dimension_semantics=("arbitrary", "arbitrary"),
            # tiles are small; stay well under every chip's physical VMEM.
            vmem_limit_bytes=32 * 1024 * 1024,
        ),
    )(x_cl, w_stem, b_stem, w_base_t, b_base, gamma, beta, wc_t)


# -----------------------------------------------------------------------------
# embed_net forward (training mode, cpool='no', bpool='avg', fuse='sum')
# -----------------------------------------------------------------------------
def embed_net_forward(params, x1, x2, modal=0):
    """Returns (x_pool, classifier(feat)) like embed_net.forward in training."""
    # TODO(synk): the pretrained ResNet50 stems (conv1/bn1/relu/maxpool/layer1)
    # and base_resnet (layer2/3/4) are stood in by one 1x1 conv + ReLU each,
    # fused below with the avg pool, bottleneck BN and classifier.
    if modal == 0:
        x_stack = jnp.stack([x1, x2], axis=0)                    # (2,B,C,H,W)
        w_stem = jnp.stack([params["w_vis"].T, params["w_th"].T], axis=0)
        b_stem = jnp.stack([params["b_vis"], params["b_th"]], axis=0)
    elif modal == 1:
        x_stack = x1[None]
        w_stem = params["w_vis"].T[None]
        b_stem = params["b_vis"][None]
    else:
        x_stack = x2[None]
        w_stem = params["w_th"].T[None]
        b_stem = params["b_th"][None]

    M, B, Cin, H, W = x_stack.shape
    HW = H * W
    x_cl = jnp.transpose(x_stack, (0, 1, 3, 4, 2)).reshape(M, B, HW, Cin)

    # (M*B) row ordering matches torch.cat((x1, x2), 0).
    x_pool, logits = fused_embed_forward(
        x_cl, w_stem, b_stem, params["w_base"].T, params["b_base"],
        params["gamma"], params["beta"], params["wc"].T)
    return x_pool, logits


# Pure-JAX reference (full f32 precision) for correctness checking.
def embed_net_forward_ref(params, x1, x2, modal=0):
    hi = jax.lax.Precision.HIGHEST

    def stem_base(x_img, w, b):
        B, C, H, W = x_img.shape
        x_cl = jnp.transpose(x_img, (0, 2, 3, 1)).reshape(B * H * W, C)
        y = jnp.maximum(jnp.dot(x_cl, w.T, precision=hi) + b, 0.0)
        g = jnp.maximum(jnp.dot(y, params["w_base"].T, precision=hi)
                        + params["b_base"], 0.0)
        return g.reshape(B, H * W, -1)

    if modal == 0:
        fm = jnp.concatenate([stem_base(x1, params["w_vis"], params["b_vis"]),
                              stem_base(x2, params["w_th"], params["b_th"])],
                             axis=0)
    elif modal == 1:
        fm = stem_base(x1, params["w_vis"], params["b_vis"])
    else:
        fm = stem_base(x2, params["w_th"], params["b_th"])

    x_pool = jnp.mean(fm, axis=1)
    mu = jnp.mean(x_pool, axis=0, keepdims=True)
    var = jnp.mean((x_pool - mu) ** 2, axis=0, keepdims=True)
    feat = (x_pool - mu) / jnp.sqrt(var + BN_EPS) * params["gamma"] + params["beta"]
    logits = jnp.dot(feat, params["wc"].T, precision=hi)
    return x_pool, logits


def init_params(key, cin=3, cmid=32, pool_dim=128, class_num=16):
    ks = jax.random.split(key, 5)

    def kaiming(k, shape):  # kaiming_normal_(a=0, mode='fan_in') for conv weights
        return jax.random.normal(k, shape, jnp.float32) * jnp.sqrt(2.0 / shape[1])

    return dict(
        w_vis=kaiming(ks[0], (cmid, cin)),
        b_vis=jnp.zeros((1, cmid), jnp.float32),
        w_th=kaiming(ks[1], (cmid, cin)),
        b_th=jnp.zeros((1, cmid), jnp.float32),
        w_base=kaiming(ks[2], (pool_dim, cmid)),
        b_base=jnp.zeros((1, pool_dim), jnp.float32),
        # bottleneck BatchNorm1d: weight ~ N(1.0, 0.01), bias = 0 (frozen)
        gamma=1.0 + 0.01 * jax.random.normal(ks[3], (1, pool_dim), jnp.float32),
        beta=jnp.zeros((1, pool_dim), jnp.float32),
        # classifier Linear(pool_dim, class_num, bias=False), weight ~ N(0, 0.001)
        wc=0.001 * jax.random.normal(ks[4], (class_num, pool_dim), jnp.float32),
    )


if __name__ == "__main__":
    key = jax.random.PRNGKey(0)
    kp, k1, k2 = jax.random.split(key, 3)

    POOL_DIM, CLASS_NUM = 128, 16
    params = init_params(kp, pool_dim=POOL_DIM, class_num=CLASS_NUM)

    B, Cin, H, W = 2, 3, 16, 16
    x1 = jax.random.normal(k1, (B, Cin, H, W), jnp.float32)  # visible imgs (NCHW)
    x2 = jax.random.normal(k2, (B, Cin, H, W), jnp.float32)  # thermal imgs (NCHW)

    x_pool, logits = embed_net_forward(params, x1, x2, modal=0)
    jax.block_until_ready((x_pool, logits))

    xp_ref, lg_ref = embed_net_forward_ref(params, x1, x2, modal=0)
    # tolerances account for default (bf16-accumulated) MXU precision in the
    # kernel vs the f32 HIGHEST reference.
    np.testing.assert_allclose(np.asarray(x_pool), np.asarray(xp_ref),
                               rtol=2e-2, atol=1e-3)
    np.testing.assert_allclose(np.asarray(logits), np.asarray(lg_ref),
                               rtol=5e-2, atol=2e-3)
    assert x_pool.shape == (2 * B, POOL_DIM)
    assert logits.shape == (2 * B, CLASS_NUM)

    print("KERNEL_OK")
</pallas_src>

<mosaic_0001>
module attributes {stable_mosaic.version = 11 : i64} {
  func.func @_fused_embed_kernel(%arg0: i32, %arg1: i32, %arg2: memref<1x2x256x3xf32, #tpu.memory_space<vmem>>, %arg3: memref<1x3x32xf32, #tpu.memory_space<vmem>>, %arg4: memref<1x1x32xf32, #tpu.memory_space<vmem>>, %arg5: memref<32x128xf32, #tpu.memory_space<vmem>>, %arg6: memref<1x128xf32, #tpu.memory_space<vmem>>, %arg7: memref<1x128xf32, #tpu.memory_space<vmem>>, %arg8: memref<1x128xf32, #tpu.memory_space<vmem>>, %arg9: memref<128x16xf32, #tpu.memory_space<vmem>>, %arg10: memref<4x128xf32, #tpu.memory_space<vmem>>, %arg11: memref<4x16xf32, #tpu.memory_space<vmem>>, %arg12: memref<2x128xf32, #tpu.memory_space<vmem>>) attributes {dimension_semantics = [#tpu.dimension_semantics<arbitrary>, #tpu.dimension_semantics<arbitrary>], iteration_bounds = array<i64: 2, 1>, scalar_prefetch = 0 : i64, scratch_operands = 1 : i64, tpu.core_type = #tpu.core_type<tc>, window_params = [{transform_indices = @transform_0, window_bounds = array<i64: 1, 2, 256, 3>}, {transform_indices = @transform_1, window_bounds = array<i64: 1, 3, 32>}, {transform_indices = @transform_2, window_bounds = array<i64: 1, 1, 32>}, {pipeline_mode = #tpu.pipeline_mode<synchronous>, transform_indices = @transform_3, window_bounds = array<i64: 32, 128>}, {pipeline_mode = #tpu.pipeline_mode<synchronous>, transform_indices = @transform_4, window_bounds = array<i64: 1, 128>}, {pipeline_mode = #tpu.pipeline_mode<synchronous>, transform_indices = @transform_5, window_bounds = array<i64: 1, 128>}, {pipeline_mode = #tpu.pipeline_mode<synchronous>, transform_indices = @transform_6, window_bounds = array<i64: 1, 128>}, {pipeline_mode = #tpu.pipeline_mode<synchronous>, transform_indices = @transform_7, window_bounds = array<i64: 128, 16>}, {pipeline_mode = #tpu.pipeline_mode<synchronous>, transform_indices = @transform_8, window_bounds = array<i64: 4, 128>}, {pipeline_mode = #tpu.pipeline_mode<synchronous>, transform_indices = @transform_9, window_bounds = array<i64: 4, 16>}]} {
    %c0 = arith.constant 0 : index
    %c0_0 = arith.constant 0 : index
    %c0_1 = arith.constant 0 : index
    %0 = vector.load %arg3[%c0, %c0_0, %c0_1] : memref<1x3x32xf32, #tpu.memory_space<vmem>>, vector<1x3x32xf32>
    %1 = vector.shape_cast %0 : vector<1x3x32xf32> to vector<3x32xf32>
    %c0_2 = arith.constant 0 : index
    %c0_3 = arith.constant 0 : index
    %c0_4 = arith.constant 0 : index
    %2 = vector.load %arg4[%c0_2, %c0_3, %c0_4] : memref<1x1x32xf32, #tpu.memory_space<vmem>>, vector<1x1x32xf32>
    %3 = vector.shape_cast %2 : vector<1x1x32xf32> to vector<1x32xf32>
    %c0_5 = arith.constant 0 : index
    %c0_6 = arith.constant 0 : index
    %4 = vector.load %arg5[%c0_5, %c0_6] : memref<32x128xf32, #tpu.memory_space<vmem>>, vector<32x128xf32>
    %c0_7 = arith.constant 0 : index
    %c0_8 = arith.constant 0 : index
    %5 = vector.load %arg6[%c0_7, %c0_8] : memref<1x128xf32, #tpu.memory_space<vmem>>, vector<1x128xf32>
    %c0_9 = arith.constant 0 : index
    %c0_10 = arith.constant 0 : index
    %c0_11 = arith.constant 0 : index
    %c0_12 = arith.constant 0 : index
    %6 = vector.load %arg2[%c0_9, %c0_10, %c0_11, %c0_12] : memref<1x2x256x3xf32, #tpu.memory_space<vmem>>, vector<1x1x256x3xf32>
    %7 = vector.shape_cast %6 : vector<1x1x256x3xf32> to vector<256x3xf32>
    %8 = vector.extract_strided_slice %7 {offsets = [0, 0], sizes = [256, 1], strides = [1, 1]} : vector<256x3xf32> to vector<256x1xf32>
    %9 = vector.extract_strided_slice %1 {offsets = [0, 0], sizes = [1, 32], strides = [1, 1]} : vector<3x32xf32> to vector<1x32xf32>
    %10 = vector.broadcast %8 : vector<256x1xf32> to vector<256x32xf32>
    %11 = vector.broadcast %9 : vector<1x32xf32> to vector<256x32xf32>
    %12 = arith.mulf %10, %11 : vector<256x32xf32>
    %13 = vector.extract_strided_slice %7 {offsets = [0, 1], sizes = [256, 1], strides = [1, 1]} : vector<256x3xf32> to vector<256x1xf32>
    %14 = vector.extract_strided_slice %1 {offsets = [1, 0], sizes = [1, 32], strides = [1, 1]} : vector<3x32xf32> to vector<1x32xf32>
    %15 = vector.broadcast %13 : vector<256x1xf32> to vector<256x32xf32>
    %16 = vector.broadcast %14 : vector<1x32xf32> to vector<256x32xf32>
    %17 = arith.mulf %15, %16 : vector<256x32xf32>
    %18 = arith.addf %12, %17 : vector<256x32xf32>
    %19 = vector.extract_strided_slice %7 {offsets = [0, 2], sizes = [256, 1], strides = [1, 1]} : vector<256x3xf32> to vector<256x1xf32>
    %20 = vector.extract_strided_slice %1 {offsets = [2, 0], sizes = [1, 32], strides = [1, 1]} : vector<3x32xf32> to vector<1x32xf32>
    %21 = vector.broadcast %19 : vector<256x1xf32> to vector<256x32xf32>
    %22 = vector.broadcast %20 : vector<1x32xf32> to vector<256x32xf32>
    %23 = arith.mulf %21, %22 : vector<256x32xf32>
    %24 = arith.addf %18, %23 : vector<256x32xf32>
    %25 = vector.broadcast %3 : vector<1x32xf32> to vector<256x32xf32>
    %26 = arith.addf %24, %25 : vector<256x32xf32>
    %cst = arith.constant 0.000000e+00 : f32
    %27 = vector.broadcast %cst : f32 to vector<256x32xf32>
    %28 = arith.maximumf %26, %27 : vector<256x32xf32>
    %cst_13 = arith.constant dense<0.000000e+00> : vector<256x128xf32>
    %29 = tpu.matmul %28, %4, %cst_13 {dimension_numbers = #tpu.dot_dimension_numbers<[1], [0], [0], [1], [0, 0, 1, 1], [], []>} : vector<256x32xf32>, vector<32x128xf32>, vector<256x128xf32> -> vector<256x128xf32>
    %30 = vector.broadcast %5 : vector<1x128xf32> to vector<256x128xf32>
    %31 = arith.addf %29, %30 : vector<256x128xf32>
    %cst_14 = arith.constant 0.000000e+00 : f32
    %32 = vector.broadcast %cst_14 : f32 to vector<256x128xf32>
    %33 = arith.maximumf %31, %32 : vector<256x128xf32>
    %cst_15 = arith.constant dense<0.000000e+00> : vector<128xf32>
    %34 = vector.multi_reduction <add>, %33, %cst_15 [0] : vector<256x128xf32> to vector<128xf32>
    %35 = vector.shape_cast %34 : vector<128xf32> to vector<1x128xf32>
    %c0_16 = arith.constant 0 : index
    %c1 = arith.constant 1 : index
    %c0_17 = arith.constant 0 : index
    %c0_18 = arith.constant 0 : index
    %36 = vector.load %arg2[%c0_16, %c1, %c0_17, %c0_18] : memref<1x2x256x3xf32, #tpu.memory_space<vmem>>, vector<1x1x256x3xf32>
    %37 = vector.shape_cast %36 : vector<1x1x256x3xf32> to vector<256x3xf32>
    %38 = vector.extract_strided_slice %37 {offsets = [0, 0], sizes = [256, 1], strides = [1, 1]} : vector<256x3xf32> to vector<256x1xf32>
    %39 = vector.extract_strided_slice %1 {offsets = [0, 0], sizes = [1, 32], strides = [1, 1]} : vector<3x32xf32> to vector<1x32xf32>
    %40 = vector.broadcast %38 : vector<256x1xf32> to vector<256x32xf32>
    %41 = vector.broadcast %39 : vector<1x32xf32> to vector<256x32xf32>
    %42 = arith.mulf %40, %41 : vector<256x32xf32>
    %43 = vector.extract_strided_slice %37 {offsets = [0, 1], sizes = [256, 1], strides = [1, 1]} : vector<256x3xf32> to vector<256x1xf32>
    %44 = vector.extract_strided_slice %1 {offsets = [1, 0], sizes = [1, 32], strides = [1, 1]} : vector<3x32xf32> to vector<1x32xf32>
    %45 = vector.broadcast %43 : vector<256x1xf32> to vector<256x32xf32>
    %46 = vector.broadcast %44 : vector<1x32xf32> to vector<256x32xf32>
    %47 = arith.mulf %45, %46 : vector<256x32xf32>
    %48 = arith.addf %42, %47 : vector<256x32xf32>
    %49 = vector.extract_strided_slice %37 {offsets = [0, 2], sizes = [256, 1], strides = [1, 1]} : vector<256x3xf32> to vector<256x1xf32>
    %50 = vector.extract_strided_slice %1 {offsets = [2, 0], sizes = [1, 32], strides = [1, 1]} : vector<3x32xf32> to vector<1x32xf32>
    %51 = vector.broadcast %49 : vector<256x1xf32> to vector<256x32xf32>
    %52 = vector.broadcast %50 : vector<1x32xf32> to vector<256x32xf32>
    %53 = arith.mulf %51, %52 : vector<256x32xf32>
    %54 = arith.addf %48, %53 : vector<256x32xf32>
    %55 = vector.broadcast %3 : vector<1x32xf32> to vector<256x32xf32>
    %56 = arith.addf %54, %55 : vector<256x32xf32>
    %cst_19 = arith.constant 0.000000e+00 : f32
    %57 = vector.broadcast %cst_19 : f32 to vector<256x32xf32>
    %58 = arith.maximumf %56, %57 : vector<256x32xf32>
    %cst_20 = arith.constant dense<0.000000e+00> : vector<256x128xf32>
    %59 = tpu.matmul %58, %4, %cst_20 {dimension_numbers = #tpu.dot_dimension_numbers<[1], [0], [0], [1], [0, 0, 1, 1], [], []>} : vector<256x32xf32>, vector<32x128xf32>, vector<256x128xf32> -> vector<256x128xf32>
    %60 = vector.broadcast %5 : vector<1x128xf32> to vector<256x128xf32>
    %61 = arith.addf %59, %60 : vector<256x128xf32>
    %cst_21 = arith.constant 0.000000e+00 : f32
    %62 = vector.broadcast %cst_21 : f32 to vector<256x128xf32>
    %63 = arith.maximumf %61, %62 : vector<256x128xf32>
    %cst_22 = arith.constant dense<0.000000e+00> : vector<128xf32>
    %64 = vector.multi_reduction <add>, %63, %cst_22 [0] : vector<256x128xf32> to vector<128xf32>
    %65 = vector.shape_cast %64 : vector<128xf32> to vector<1x128xf32>
    %66 = tpu.concatenate %35, %65 in 0 : vector<1x128xf32>, vector<1x128xf32> -> vector<2x128xf32>
    %c0_i32 = arith.constant 0 : i32
    %67 = arith.cmpi eq, %arg1, %c0_i32 : i32
    %68 = arith.extui %67 : i1 to i32
    %c0_i32_23 = arith.constant 0 : i32
    %69 = arith.cmpi ne, %68, %c0_i32_23 : i32
    scf.if %69 {
      %c0_30 = arith.constant 0 : index
      %c0_31 = arith.constant 0 : index
      %81 = vector.load %arg12[%c0_30, %c0_31] : memref<2x128xf32, #tpu.memory_space<vmem>>, vector<2x128xf32>
      tpu.vector_store %arg12[%c0_30, %c0_31], %66 {strides = array<i32>} : memref<2x128xf32, #tpu.memory_space<vmem>>, vector<2x128xf32>,
    } else {
    }
    %c0_i32_24 = arith.constant 0 : i32
    %70 = arith.cmpi ne, %arg1, %c0_i32_24 : i32
    %71 = arith.extui %70 : i1 to i32
    %c0_i32_25 = arith.constant 0 : i32
    %72 = arith.cmpi ne, %71, %c0_i32_25 : i32
    scf.if %72 {
      %c0_30 = arith.constant 0 : index
      %c0_31 = arith.constant 0 : index
      %81 = vector.load %arg12[%c0_30, %c0_31] : memref<2x128xf32, #tpu.memory_space<vmem>>, vector<2x128xf32>
      %82 = arith.addf %81, %66 : vector<2x128xf32>
      %c0_32 = arith.constant 0 : index
      %c0_33 = arith.constant 0 : index
      %83 = vector.load %arg12[%c0_32, %c0_33] : memref<2x128xf32, #tpu.memory_space<vmem>>, vector<2x128xf32>
      tpu.vector_store %arg12[%c0_32, %c0_33], %82 {strides = array<i32>} : memref<2x128xf32, #tpu.memory_space<vmem>>, vector<2x128xf32>,
    } else {
    }
    %c0_i32_26 = arith.constant 0 : i32
    %73 = arith.cmpi eq, %arg1, %c0_i32_26 : i32
    %74 = arith.extui %73 : i1 to i32
    %c0_i32_27 = arith.constant 0 : i32
    %75 = arith.cmpi ne, %74, %c0_i32_27 : i32
    scf.if %75 {
      %c0_30 = arith.constant 0 : index
      %c0_31 = arith.constant 0 : index
      %81 = vector.load %arg12[%c0_30, %c0_31] : memref<2x128xf32, #tpu.memory_space<vmem>>, vector<2x128xf32>
      %cst_32 = arith.constant 3.906250e-03 : f32
      %82 = vector.broadcast %cst_32 : f32 to vector<2x128xf32>
      %83 = arith.mulf %81, %82 : vector<2x128xf32>
      %c0_i32_33 = arith.constant 0 : i32
      %84 = arith.cmpi eq, %arg0, %c0_i32_33 : i32
      %85 = arith.extui %84 : i1 to i32
      %c0_i32_34 = arith.constant 0 : i32
      %86 = arith.cmpi ne, %85, %c0_i32_34 : i32
      scf.if %86 {
        %c0_37 = arith.constant 0 : index
        %c0_38 = arith.constant 0 : index
        %90 = vector.load %arg10[%c0_37, %c0_38] : memref<4x128xf32, #tpu.memory_space<vmem>>, vector<2x128xf32>
        tpu.vector_store %arg10[%c0_37, %c0_38], %83 {strides = array<i32>} : memref<4x128xf32, #tpu.memory_space<vmem>>, vector<2x128xf32>,
      } else {
      }
      %c1_i32_35 = arith.constant 1 : i32
      %87 = arith.cmpi eq, %arg0, %c1_i32_35 : i32
      %88 = arith.extui %87 : i1 to i32
      %c0_i32_36 = arith.constant 0 : i32
      %89 = arith.cmpi ne, %88, %c0_i32_36 : i32
      scf.if %89 {
        %c2 = arith.constant 2 : index
        %c0_37 = arith.constant 0 : index
        %90 = vector.load %arg10[%c2, %c0_37] : memref<4x128xf32, #tpu.memory_space<vmem>>, vector<2x128xf32>
        tpu.vector_store %arg10[%c2, %c0_37], %83 {strides = array<i32>} : memref<4x128xf32, #tpu.memory_space<vmem>>, vector<2x128xf32>,
      } else {
      }
    } else {
    }
    %c1_i32 = arith.constant 1 : i32
    %76 = arith.cmpi eq, %arg0, %c1_i32 : i32
    %c0_i32_28 = arith.constant 0 : i32
    %77 = arith.cmpi eq, %arg1, %c0_i32_28 : i32
    %78 = arith.andi %76, %77 : i1
    %79 = arith.extui %78 : i1 to i32
    %c0_i32_29 = arith.constant 0 : i32
    %80 = arith.cmpi ne, %79, %c0_i32_29 : i32
    scf.if %80 {
      %c0_30 = arith.constant 0 : index
      %c0_31 = arith.constant 0 : index
      %81 = vector.load %arg10[%c0_30, %c0_31] : memref<4x128xf32, #tpu.memory_space<vmem>>, vector<4x128xf32>
      %cst_32 = arith.constant dense<0.000000e+00> : vector<128xf32>
      %82 = vector.multi_reduction <add>, %81, %cst_32 [0] : vector<4x128xf32> to vector<128xf32>
      %83 = vector.shape_cast %82 : vector<128xf32> to vector<1x128xf32>
      %cst_33 = arith.constant 4.000000e+00 : f32
      %84 = vector.broadcast %cst_33 : f32 to vector<1x128xf32>
      %85 = arith.divf %83, %84 : vector<1x128xf32>
      %86 = vector.broadcast %85 : vector<1x128xf32> to vector<4x128xf32>
      %87 = arith.subf %81, %86 : vector<4x128xf32>
      %88 = arith.mulf %87, %87 : vector<4x128xf32>
      %cst_34 = arith.constant dense<0.000000e+00> : vector<128xf32>
      %89 = vector.multi_reduction <add>, %88, %cst_34 [0] : vector<4x128xf32> to vector<128xf32>
      %90 = vector.shape_cast %89 : vector<128xf32> to vector<1x128xf32>
      %cst_35 = arith.constant 4.000000e+00 : f32
      %91 = vector.broadcast %cst_35 : f32 to vector<1x128xf32>
      %92 = arith.divf %90, %91 : vector<1x128xf32>
      %93 = vector.broadcast %85 : vector<1x128xf32> to vector<4x128xf32>
      %94 = arith.subf %81, %93 : vector<4x128xf32>
      %cst_36 = arith.constant 9.99999974E-6 : f32
      %95 = vector.broadcast %cst_36 : f32 to vector<1x128xf32>
      %96 = arith.addf %92, %95 : vector<1x128xf32>
      %97 = math.rsqrt %96 : vector<1x128xf32>
      %98 = vector.broadcast %97 : vector<1x128xf32> to vector<4x128xf32>
      %99 = arith.mulf %94, %98 : vector<4x128xf32>
      %c0_37 = arith.constant 0 : index
      %c0_38 = arith.constant 0 : index
      %100 = vector.load %arg7[%c0_37, %c0_38] : memref<1x128xf32, #tpu.memory_space<vmem>>, vector<1x128xf32>
      %101 = vector.broadcast %100 : vector<1x128xf32> to vector<4x128xf32>
      %102 = arith.mulf %99, %101 : vector<4x128xf32>
      %c0_39 = arith.constant 0 : index
      %c0_40 = arith.constant 0 : index
      %103 = vector.load %arg8[%c0_39, %c0_40] : memref<1x128xf32, #tpu.memory_space<vmem>>, vector<1x128xf32>
      %104 = vector.broadcast %103 : vector<1x128xf32> to vector<4x128xf32>
      %105 = arith.addf %102, %104 : vector<4x128xf32>
      %c0_41 = arith.constant 0 : index
      %c0_42 = arith.constant 0 : index
      %106 = vector.load %arg9[%c0_41, %c0_42] : memref<128x16xf32, #tpu.memory_space<vmem>>, vector<128x16xf32>
      %cst_43 = arith.constant dense<0.000000e+00> : vector<4x16xf32>
      %107 = tpu.matmul %105, %106, %cst_43 {dimension_numbers = #tpu.dot_dimension_numbers<[1], [0], [0], [1], [0, 0, 1, 1], [], []>} : vector<4x128xf32>, vector<128x16xf32>, vector<4x16xf32> -> vector<4x16xf32>
      %c0_44 = arith.constant 0 : index
      %c0_45 = arith.constant 0 : index
      %108 = vector.load %arg11[%c0_44, %c0_45] : memref<4x16xf32, #tpu.memory_space<vmem>>, vector<4x16xf32>
      tpu.vector_store %arg11[%c0_44, %c0_45], %107 {strides = array<i32>} : memref<4x16xf32, #tpu.memory_space<vmem>>, vector<4x16xf32>,
    } else {
    }
    return
  }
  func.func @transform_0(%arg0: i32, %arg1: i32) -> (i32, i32, i32, i32) {
    %c0_i32 = arith.constant 0 : i32
    %c0_i32_0 = arith.constant 0 : i32
    %c0_i32_1 = arith.constant 0 : i32
    return %arg0, %c0_i32, %arg1, %c0_i32_0 : i32, i32, i32, i32
  }
  func.func @transform_1(%arg0: i32, %arg1: i32) -> (i32, i32, i32) {
    %c0_i32 = arith.constant 0 : i32
    %c0_i32_0 = arith.constant 0 : i32
    %c0_i32_1 = arith.constant 0 : i32
    return %arg0, %c0_i32, %c0_i32_0 : i32, i32, i32
  }
  func.func @transform_2(%arg0: i32, %arg1: i32) -> (i32, i32, i32) {
    %c0_i32 = arith.constant 0 : i32
    %c0_i32_0 = arith.constant 0 : i32
    %c0_i32_1 = arith.constant 0 : i32
    return %arg0, %c0_i32, %c0_i32_0 : i32, i32, i32
  }
  func.func @transform_3(%arg0: i32, %arg1: i32) -> (i32, i32) {
    %c0_i32 = arith.constant 0 : i32
    %c0_i32_0 = arith.constant 0 : i32
    %c0_i32_1 = arith.constant 0 : i32
    return %c0_i32, %c0_i32_0 : i32, i32
  }
  func.func @transform_4(%arg0: i32, %arg1: i32) -> (i32, i32) {
    %c0_i32 = arith.constant 0 : i32
    %c0_i32_0 = arith.constant 0 : i32
    %c0_i32_1 = arith.constant 0 : i32
    return %c0_i32, %c0_i32_0 : i32, i32
  }
  func.func @transform_5(%arg0: i32, %arg1: i32) -> (i32, i32) {
    %c0_i32 = arith.constant 0 : i32
    %c0_i32_0 = arith.constant 0 : i32
    %c0_i32_1 = arith.constant 0 : i32
    return %c0_i32, %c0_i32_0 : i32, i32
  }
  func.func @transform_6(%arg0: i32, %arg1: i32) -> (i32, i32) {
    %c0_i32 = arith.constant 0 : i32
    %c0_i32_0 = arith.constant 0 : i32
    %c0_i32_1 = arith.constant 0 : i32
    return %c0_i32, %c0_i32_0 : i32, i32
  }
  func.func @transform_7(%arg0: i32, %arg1: i32) -> (i32, i32) {
    %c0_i32 = arith.constant 0 : i32
    %c0_i32_0 = arith.constant 0 : i32
    %c0_i32_1 = arith.constant 0 : i32
    return %c0_i32, %c0_i32_0 : i32, i32
  }
  func.func @transform_8(%arg0: i32, %arg1: i32) -> (i32, i32) {
    %c0_i32 = arith.constant 0 : i32
    %c0_i32_0 = arith.constant 0 : i32
    %c0_i32_1 = arith.constant 0 : i32
    return %c0_i32, %c0_i32_0 : i32, i32
  }
  func.func @transform_9(%arg0: i32, %arg1: i32) -> (i32, i32) {
    %c0_i32 = arith.constant 0 : i32
    %c0_i32_0 = arith.constant 0 : i32
    %c0_i32_1 = arith.constant 0 : i32
    return %c0_i32, %c0_i32_0 : i32, i32
  }
}

</mosaic_0001>

<llo_original>
// kernel: tpu_custom_call.1
$region0: #{tpu_custom_call.1}
  #allocation0 [shape = 'u32[]', space=smem, size = 0x4, offset = 0x4, fixed_abs, tag = 'smem constant byte address 0x4 - core index']
  #allocation1 [shape = 'u32[144,128]{1,0:T(1,128)}', space=vmem, size = 0x12000, scoped, tag = 'internal scratch']
  #allocation2 [shape = 'f32[2,128]{1,0:T(2,128)}', space=vmem, size = 0x400, scoped, tag = 'scratch operand']
  %s0 = inlined_call_operand.vmem [shape: f32[2,2,256,3], index: 0, kind: input, shape index: {}]
  %s1 = inlined_call_operand.vmem [shape: f32[2,3,32], index: 1, kind: input, shape index: {}]
  %s2 = inlined_call_operand.vmem [shape: f32[2,1,32], index: 2, kind: input, shape index: {}]
  %s3 = inlined_call_operand.vmem [shape: f32[32,128], index: 3, kind: input, shape index: {}]
  %s4 = inlined_call_operand.vmem [shape: f32[1,128], index: 4, kind: input, shape index: {}]
  %s5 = inlined_call_operand.vmem [shape: f32[1,128], index: 5, kind: input, shape index: {}]
  %s6 = inlined_call_operand.vmem [shape: f32[1,128], index: 6, kind: input, shape index: {}]
  %s7 = inlined_call_operand.vmem [shape: f32[128,16], index: 7, kind: input, shape index: {}]
  %s8 = inlined_call_operand.hbm [shape: f32[4,128], index: 8, kind: output, shape index: {0}]
  %s9 = inlined_call_operand.hbm [shape: f32[4,16], index: 9, kind: output, shape index: {1}]
  %10 = xla_tuple %s8, %s9
  %s11 = sld [smem:[#allocation0]]
  $region97: #{tpu_custom_call.1} parent=0
    _
  %s13 = ssub.s32 1, %s11
  %s14 = scalar_select 0, %s13, %s11
  $region1: #{tpu_custom_call.1} parent=0
    #allocation3 [shape = 'u8[2048]{0}', space=vmem, size = 0x800, scoped, tag = 'output window, operand 0, single buffered']
    #allocation4 [shape = 's32[2]{0}', space=sflag, size = 0x8, scoped, tag = 'scoped memory for tpu_custom_call.1']
    #allocation5 [shape = 'u8[2048]{0}', space=vmem, size = 0x800, scoped, tag = 'output window, operand 1, single buffered']
    #allocation6 [shape = 's32[1]{0}', space=sflag, size = 0x4, scoped, tag = 'scoped memory for tpu_custom_call.1']
    %15 = vsyncpa [#allocation4], 0
    %16 = vsyncpa [#allocation6], 0
    loop: start=0, step=1, limit=4
    $region2: #{tpu_custom_call.1} parent=1 // loop_pre_header
      _
    $region3: #{tpu_custom_call.1} parent=1 // loop_header
      %s18 = sphi 0, %s22
      %p19 = scmp.ge.s32.totalorder %s18, 4
      %s25 = sphi 0, %s37
      %s26 = sphi 0, %s33
      %s27 = sphi 0, %s25
      %s28 = sphi 0, %s26
      %s29 = sphi 0, %s27
      %s30 = sphi 0, %s28
      %s42 = sphi 0, %s44
      %s45 = sphi 0, %s42
      %s46 = sphi 0, %s45
      %s62 = sphi 0, %s46
      %s68 = sphi 0, %s70
      %s71 = sphi 0, %s68
      %s72 = sphi 0, %s71
      %s88 = sphi 0, %s72
      %s94 = sphi 0, %s96
      %s97 = sphi 0, %s94
      %s98 = sphi 0, %s97
      %s114 = sphi 0, %s98
      %s118 = sphi 0, %s118
      %s120 = sphi 0, %s118
      %s121 = sphi 0, %s120
      %s135 = sphi 0, %s121
      %s139 = sphi 0, %s139
      %s141 = sphi 0, %s139
      %s142 = sphi 0, %s141
      %s156 = sphi 0, %s142
      %s160 = sphi 0, %s160
      %s162 = sphi 0, %s160
      %s163 = sphi 0, %s162
      %s177 = sphi 0, %s163
      %s181 = sphi 0, %s181
      %s183 = sphi 0, %s181
      %s184 = sphi 0, %s183
      %s198 = sphi 0, %s184
      %s202 = sphi 0, %s202
      %s204 = sphi 0, %s202
      %s205 = sphi 0, %s204
      %s219 = sphi 0, %s205
      %s223 = sphi 0, %s223
      %s225 = sphi 0, %s223
      %s226 = sphi 0, %s225
      %s240 = sphi 0, %s226
      %s244 = sphi 0, %s244
      %s246 = sphi 0, %s244
      %s247 = sphi 0, %s246
      %s261 = sphi 0, %s247
    $region4: #{tpu_custom_call.1} parent=1 // loop_header_branch
      %21 = sbr.rel (%p19) target = $region8
    $region5: #{tpu_custom_call.1} parent=1 // loop_body
      %s23 = ssub.s32 %s18, 1
      %s24 = ssub.s32 %s18, 2
      %s31 = sadd.s32 1, %s26
      %p32 = scmp.ge.s32.totalorder %s31, 1
      %s33 = scalar_select %p32, 0, %s31
      %s34 = sadd.s32 1, %s25
      %s35 = scalar_select %p32, %s34, %s25
      %p36 = scmp.ge.s32.totalorder %s35, 2
      %s37 = scalar_select %p36, 0, %s35
      %s38 = ssub.s32 %s25, %s37
      %s39 = ssub.s32 %s26, %s33
      %s40 = sor.u32 %s38, %s39
      %p41 = scmp.eq.s32.totalorder %s40, 0
      %s43 = sadd.s32 %s42, 1
      %s44 = scalar_select %p41, %s42, %s43
      %p47 = pneg %p41
      %p48 = scmp.eq.s32.totalorder %s18, 1
      %p49 = por %p47, %p48
      %p50 = scmp.ne.s32.totalorder %s42, %s45
      %p51 = scmp.eq.s32.totalorder %s18, 0
      %p52 = por %p50, %p51
      %p53 = scmp.ne.s32.totalorder %s42, %s45
      %p54 = scmp.eq.s32.totalorder %s23, 1
      %p55 = por %p53, %p54
      %p56 = scmp.ne.s32.totalorder %s45, %s46
      %p57 = scmp.eq.s32.totalorder %s23, 0
      %p58 = por %p56, %p57
      %p59 = scmp.ne.s32.totalorder %s45, %s46
      %p60 = scmp.eq.s32.totalorder %s24, 1
      %p61 = por %p59, %p60
      %p63 = scmp.ne.s32.totalorder %s46, %s62
      %p64 = scmp.eq.s32.totalorder %s24, 0
      %p65 = por %p63, %p64
      %s66 = ssub.s32 %s25, %s37
      %p67 = scmp.eq.s32.totalorder %s66, 0
      %s69 = sadd.s32 %s68, 1
      %s70 = scalar_select %p67, %s68, %s69
      %p73 = pneg %p67
      %p74 = scmp.eq.s32.totalorder %s18, 1
      %p75 = por %p73, %p74
      %p76 = scmp.ne.s32.totalorder %s68, %s71
      %p77 = scmp.eq.s32.totalorder %s18, 0
      %p78 = por %p76, %p77
      %p79 = scmp.ne.s32.totalorder %s68, %s71
      %p80 = scmp.eq.s32.totalorder %s23, 1
      %p81 = por %p79, %p80
      %p82 = scmp.ne.s32.totalorder %s71, %s72
      %p83 = scmp.eq.s32.totalorder %s23, 0
      %p84 = por %p82, %p83
      %p85 = scmp.ne.s32.totalorder %s71, %s72
      %p86 = scmp.eq.s32.totalorder %s24, 1
      %p87 = por %p85, %p86
      %p89 = scmp.ne.s32.totalorder %s72, %s88
      %p90 = scmp.eq.s32.totalorder %s24, 0
      %p91 = por %p89, %p90
      %s92 = ssub.s32 %s25, %s37
      %p93 = scmp.eq.s32.totalorder %s92, 0
      %s95 = sadd.s32 %s94, 1
      %s96 = scalar_select %p93, %s94, %s95
      %p99 = pneg %p93
      %p100 = scmp.eq.s32.totalorder %s18, 1
      %p101 = por %p99, %p100
      %p102 = scmp.ne.s32.totalorder %s94, %s97
      %p103 = scmp.eq.s32.totalorder %s18, 0
      %p104 = por %p102, %p103
      %p105 = scmp.ne.s32.totalorder %s94, %s97
      %p106 = scmp.eq.s32.totalorder %s23, 1
      %p107 = por %p105, %p106
      %p108 = scmp.ne.s32.totalorder %s97, %s98
      %p109 = scmp.eq.s32.totalorder %s23, 0
      %p110 = por %p108, %p109
      %p111 = scmp.ne.s32.totalorder %s97, %s98
      %p112 = scmp.eq.s32.totalorder %s24, 1
      %p113 = por %p111, %p112
      %p115 = scmp.ne.s32.totalorder %s98, %s114
      %p116 = scmp.eq.s32.totalorder %s24, 0
      %p117 = por %p115, %p116
      %s119 = sadd.s32 %s118, 1
      %p122 = scmp.eq.s32.totalorder %s18, 1
      %p123 = scmp.ne.s32.totalorder %s118, %s120
      %p124 = scmp.eq.s32.totalorder %s18, 0
      %p125 = por %p123, %p124
      %p126 = scmp.ne.s32.totalorder %s118, %s120
      %p127 = scmp.eq.s32.totalorder %s23, 1
      %p128 = por %p126, %p127
      %p129 = scmp.ne.s32.totalorder %s120, %s121
      %p130 = scmp.eq.s32.totalorder %s23, 0
      %p131 = por %p129, %p130
      %p132 = scmp.ne.s32.totalorder %s120, %s121
      %p133 = scmp.eq.s32.totalorder %s24, 1
      %p134 = por %p132, %p133
      %p136 = scmp.ne.s32.totalorder %s121, %s135
      %p137 = scmp.eq.s32.totalorder %s24, 0
      %p138 = por %p136, %p137
      %s140 = sadd.s32 %s139, 1
      %p143 = scmp.eq.s32.totalorder %s18, 1
      %p144 = scmp.ne.s32.totalorder %s139, %s141
      %p145 = scmp.eq.s32.totalorder %s18, 0
      %p146 = por %p144, %p145
      %p147 = scmp.ne.s32.totalorder %s139, %s141
      %p148 = scmp.eq.s32.totalorder %s23, 1
      %p149 = por %p147, %p148
      %p150 = scmp.ne.s32.totalorder %s141, %s142
      %p151 = scmp.eq.s32.totalorder %s23, 0
      %p152 = por %p150, %p151
      %p153 = scmp.ne.s32.totalorder %s141, %s142
      %p154 = scmp.eq.s32.totalorder %s24, 1
      %p155 = por %p153, %p154
      %p157 = scmp.ne.s32.totalorder %s142, %s156
      %p158 = scmp.eq.s32.totalorder %s24, 0
      %p159 = por %p157, %p158
      %s161 = sadd.s32 %s160, 1
      %p164 = scmp.eq.s32.totalorder %s18, 1
      %p165 = scmp.ne.s32.totalorder %s160, %s162
      %p166 = scmp.eq.s32.totalorder %s18, 0
      %p167 = por %p165, %p166
      %p168 = scmp.ne.s32.totalorder %s160, %s162
      %p169 = scmp.eq.s32.totalorder %s23, 1
      %p170 = por %p168, %p169
      %p171 = scmp.ne.s32.totalorder %s162, %s163
      %p172 = scmp.eq.s32.totalorder %s23, 0
      %p173 = por %p171, %p172
      %p174 = scmp.ne.s32.totalorder %s162, %s163
      %p175 = scmp.eq.s32.totalorder %s24, 1
      %p176 = por %p174, %p175
      %p178 = scmp.ne.s32.totalorder %s163, %s177
      %p179 = scmp.eq.s32.totalorder %s24, 0
      %p180 = por %p178, %p179
      %s182 = sadd.s32 %s181, 1
      %p185 = scmp.eq.s32.totalorder %s18, 1
      %p186 = scmp.ne.s32.totalorder %s181, %s183
      %p187 = scmp.eq.s32.totalorder %s18, 0
      %p188 = por %p186, %p187
      %p189 = scmp.ne.s32.totalorder %s181, %s183
      %p190 = scmp.eq.s32.totalorder %s23, 1
      %p191 = por %p189, %p190
      %p192 = scmp.ne.s32.totalorder %s183, %s184
      %p193 = scmp.eq.s32.totalorder %s23, 0
      %p194 = por %p192, %p193
      %p195 = scmp.ne.s32.totalorder %s183, %s184
      %p196 = scmp.eq.s32.totalorder %s24, 1
      %p197 = por %p195, %p196
      %p199 = scmp.ne.s32.totalorder %s184, %s198
      %p200 = scmp.eq.s32.totalorder %s24, 0
      %p201 = por %p199, %p200
      %s203 = sadd.s32 %s202, 1
      %p206 = scmp.eq.s32.totalorder %s18, 1
      %p207 = scmp.ne.s32.totalorder %s202, %s204
      %p208 = scmp.eq.s32.totalorder %s18, 0
      %p209 = por %p207, %p208
      %p210 = scmp.ne.s32.totalorder %s202, %s204
      %p211 = scmp.eq.s32.totalorder %s23, 1
      %p212 = por %p210, %p211
      %p213 = scmp.ne.s32.totalorder %s204, %s205
      %p214 = scmp.eq.s32.totalorder %s23, 0
      %p215 = por %p213, %p214
      %p216 = scmp.ne.s32.totalorder %s204, %s205
      %p217 = scmp.eq.s32.totalorder %s24, 1
      %p218 = por %p216, %p217
      %p220 = scmp.ne.s32.totalorder %s205, %s219
      %p221 = scmp.eq.s32.totalorder %s24, 0
      %p222 = por %p220, %p221
      %s224 = sadd.s32 %s223, 1
      %p227 = scmp.eq.s32.totalorder %s18, 1
      %p228 = scmp.ne.s32.totalorder %s223, %s225
      %p229 = scmp.eq.s32.totalorder %s18, 0
      %p230 = por %p228, %p229
      %p231 = scmp.ne.s32.totalorder %s223, %s225
      %p232 = scmp.eq.s32.totalorder %s23, 1
      %p233 = por %p231, %p232
      %p234 = scmp.ne.s32.totalorder %s225, %s226
      %p235 = scmp.eq.s32.totalorder %s23, 0
      %p236 = por %p234, %p235
      %p237 = scmp.ne.s32.totalorder %s225, %s226
      %p238 = scmp.eq.s32.totalorder %s24, 1
      %p239 = por %p237, %p238
      %p241 = scmp.ne.s32.totalorder %s226, %s240
      %p242 = scmp.eq.s32.totalorder %s24, 0
      %p243 = por %p241, %p242
      %s245 = sadd.s32 %s244, 1
      %p248 = scmp.eq.s32.totalorder %s18, 1
      %p249 = scmp.ne.s32.totalorder %s244, %s246
      %p250 = scmp.eq.s32.totalorder %s18, 0
      %p251 = por %p249, %p250
      %p252 = scmp.ne.s32.totalorder %s244, %s246
      %p253 = scmp.eq.s32.totalorder %s23, 1
      %p254 = por %p252, %p253
      %p255 = scmp.ne.s32.totalorder %s246, %s247
      %p256 = scmp.eq.s32.totalorder %s23, 0
      %p257 = por %p255, %p256
      %p258 = scmp.ne.s32.totalorder %s246, %s247
      %p259 = scmp.eq.s32.totalorder %s24, 1
      %p260 = por %p258, %p259
      %p262 = scmp.ne.s32.totalorder %s247, %s261
      %p263 = scmp.eq.s32.totalorder %s24, 0
      %p264 = por %p262, %p263
      %p265 = scmp.le.s32.totalorder 1, %s18
      %p266 = scmp.lt.s32.totalorder %s18, 3
      %p267 = pnand %p265, %p266
      %p268 = pneg %p267
      // Predicated region
      $region9: #{tpu_custom_call.1} parent=5 // pred_check
        _
      $region10: #{tpu_custom_call.1} parent=5 // pred_check_branch
        %270 = sbr.rel (%p267) target = $region12
      $region11: #{tpu_custom_call.1} parent=5 // pred_region
        %s271 = ssub.s32 %s18, 1
        // Predicated region
        $region13: #{tpu_custom_call.1} parent=11 // pred_check
          %p272 = pneg %p131
        $region14: #{tpu_custom_call.1} parent=11 // pred_check_branch
          %274 = sbr.rel (%p272) target = $region16
        $region15: #{tpu_custom_call.1} parent=11 // pred_region
          _
        $region16: #{tpu_custom_call.1} parent=11 // pred_fallthru
          _
        // Predicated region
        $region17: #{tpu_custom_call.1} parent=11 // pred_check
          %p275 = pneg %p152
        $region18: #{tpu_custom_call.1} parent=11 // pred_check_branch
          %277 = sbr.rel (%p275) target = $region20
        $region19: #{tpu_custom_call.1} parent=11 // pred_region
          _
        $region20: #{tpu_custom_call.1} parent=11 // pred_fallthru
          _
        // Predicated region
        $region21: #{tpu_custom_call.1} parent=11 // pred_check
          %p278 = pneg %p173
        $region22: #{tpu_custom_call.1} parent=11 // pred_check_branch
          %280 = sbr.rel (%p278) target = $region24
        $region23: #{tpu_custom_call.1} parent=11 // pred_region
          _
        $region24: #{tpu_custom_call.1} parent=11 // pred_fallthru
          _
        // Predicated region
        $region25: #{tpu_custom_call.1} parent=11 // pred_check
          %p281 = pneg %p194
        $region26: #{tpu_custom_call.1} parent=11 // pred_check_branch
          %283 = sbr.rel (%p281) target = $region28
        $region27: #{tpu_custom_call.1} parent=11 // pred_region
          _
        $region28: #{tpu_custom_call.1} parent=11 // pred_fallthru
          _
        // Predicated region
        $region29: #{tpu_custom_call.1} parent=11 // pred_check
          %p284 = pneg %p215
        $region30: #{tpu_custom_call.1} parent=11 // pred_check_branch
          %286 = sbr.rel (%p284) target = $region32
        $region31: #{tpu_custom_call.1} parent=11 // pred_region
          _
        $region32: #{tpu_custom_call.1} parent=11 // pred_fallthru
          _
      $region12: #{tpu_custom_call.1} parent=5 // pred_fallthru
        _
      %p287 = scmp.lt.s32.totalorder %s18, 2
      // Predicated region
      $region33: #{tpu_custom_call.1} parent=5 // pred_check
        %p288 = pneg %p287
      $region34: #{tpu_custom_call.1} parent=5 // pred_check_branch
        %290 = sbr.rel (%p288) target = $region36
      $region35: #{tpu_custom_call.1} parent=5 // pred_region
        // Predicated region
        $region37: #{tpu_custom_call.1} parent=35 // pred_check
          %p291 = pneg %p52
        $region38: #{tpu_custom_call.1} parent=35 // pred_check_branch
          %293 = sbr.rel (%p291) target = $region40
        $region39: #{tpu_custom_call.1} parent=35 // pred_region
          %s294 = smul.u32 32, %s26
          %p295 = scmp.lt.s32.totalorder %s25, 1
          %s296 = scalar_select %p295, %s25, 1
          %p297 = scmp.lt.s32.totalorder %s294, 31
          %s298 = scalar_select %p297, %s294, 31
          %s299 = smul.addr %s296, 64
          %s300 = sadd.s32 %s298, %s299
          %s301 = smul.addr %s300, 8
          %s302 = scalar_lea.vmem %s0, %s301
          %s303 = smul.u32 32, %s26
        $region40: #{tpu_custom_call.1} parent=35 // pred_fallthru
          _
        // Predicated region
        $region41: #{tpu_custom_call.1} parent=35 // pred_check
          %p304 = pneg %p78
        $region42: #{tpu_custom_call.1} parent=35 // pred_check_branch
          %306 = sbr.rel (%p304) target = $region44
        $region43: #{tpu_custom_call.1} parent=35 // pred_region
          %p307 = scmp.lt.s32.totalorder %s25, 1
          %s308 = scalar_select %p307, %s25, 1
          %s309 = smul.addr %s308, 4
          %s310 = scalar_lea.vmem %s1, %s309
        $region44: #{tpu_custom_call.1} parent=35 // pred_fallthru
          _
        // Predicated region
        $region45: #{tpu_custom_call.1} parent=35 // pred_check
          %p311 = pneg %p104
        $region46: #{tpu_custom_call.1} parent=35 // pred_check_branch
          %313 = sbr.rel (%p311) target = $region48
        $region47: #{tpu_custom_call.1} parent=35 // pred_region
          %p314 = scmp.lt.s32.totalorder %s25, 1
          %s315 = scalar_select %p314, %s25, 1
          %s316 = scalar_lea.vmem %s2, %s315
        $region48: #{tpu_custom_call.1} parent=35 // pred_fallthru
          _
      $region36: #{tpu_custom_call.1} parent=5 // pred_fallthru
        _
      %p317 = scmp.le.s32.totalorder 1, %s18
      %p318 = scmp.lt.s32.totalorder %s18, 3
      %p319 = pnand %p317, %p318
      %p320 = pneg %p319
      // Predicated region
      $region49: #{tpu_custom_call.1} parent=5 // pred_check
        _
      $region50: #{tpu_custom_call.1} parent=5 // pred_check_branch
        %322 = sbr.rel (%p319) target = $region52
      $region51: #{tpu_custom_call.1} parent=5 // pred_region
        %s323 = ssub.s32 %s18, 1
        %s324 = smul.u32 32, %s28
        %p325 = scmp.lt.s32.totalorder %s27, 1
        %s326 = scalar_select %p325, %s27, 1
        %p327 = scmp.lt.s32.totalorder %s324, 31
        %s328 = scalar_select %p327, %s324, 31
        %s329 = smul.addr %s326, 64
        %s330 = sadd.s32 %s328, %s329
        %s331 = smul.addr %s330, 8
        %s332 = scalar_lea.vmem %s0, %s331
        %p333 = pneg %p58
        %p334 = pneg %p55
        %p335 = scmp.lt.s32.totalorder %s27, 1
        %s336 = scalar_select %p335, %s27, 1
        %s337 = smul.addr %s336, 4
        %s338 = scalar_lea.vmem %s1, %s337
        %p339 = pneg %p84
        %p340 = pneg %p81
        %p341 = scmp.lt.s32.totalorder %s27, 1
        %s342 = scalar_select %p341, %s27, 1
        %s343 = scalar_lea.vmem %s2, %s342
        %p344 = pneg %p110
        %p345 = pneg %p107
        %p346 = pneg %p131
        %p347 = pneg %p128
        %p348 = pneg %p152
        %p349 = pneg %p149
        %p350 = pneg %p173
        %p351 = pneg %p170
        %p352 = pneg %p194
        %p353 = pneg %p191
        %p354 = pneg %p215
        %p355 = pneg %p212
        %p356 = pneg %p236
        %p357 = pneg %p233
        %p358 = pneg %p257
        %p359 = pneg %p254
        %s360 = smul.u32 32, %s28
        %p361 = scmp.lt.s32.totalorder %s27, 1
        %s362 = scalar_select %p361, %s27, 1
        %p363 = scmp.lt.s32.totalorder %s360, 31
        %s364 = scalar_select %p363, %s360, 31
        %s365 = smul.addr %s362, 64
        %s366 = sadd.s32 %s364, %s365
        %s367 = smul.addr %s366, 8
        %s368 = scalar_lea.vmem %s0, %s367
        %s369 = smul.u32 32, %s28
        %p370 = scmp.lt.s32.totalorder %s27, 1
        %s371 = scalar_select %p370, %s27, 1
        %s372 = smul.addr %s371, 4
        %s373 = scalar_lea.vmem %s1, %s372
        %p374 = scmp.lt.s32.totalorder %s27, 1
        %s375 = scalar_select %p374, %s27, 1
        %s376 = scalar_lea.vmem %s2, %s375
        %v377 = vld [vmem:[%s373] sm:$0x7]
        %v378 = vld [vmem:[%s376] sm:$0x1]
        %v379 = vld [vmem:[%s3] sm:$0xff]
        %v380 = vld [vmem:[%s3 + $0x8] sm:$0xff]
        %v381 = vld [vmem:[%s3 + $0x10] sm:$0xff]
        %v382 = vld [vmem:[%s3 + $0x18] sm:$0xff]
        %v383 = vld [vmem:[%s4] sm:$0x1]
        %v384 = vld [vmem:[%s368] sm:$0xff]
        %v385 = vld [vmem:[%s368 + $0x8] sm:$0xff]
        %v386 = vld [vmem:[%s368 + $0x10] sm:$0xff]
        %v387 = vld [vmem:[%s368 + $0x18] sm:$0xff]
        %v388 = vld [vmem:[%s368 + $0x20] sm:$0xff]
        %v389 = vld [vmem:[%s368 + $0x28] sm:$0xff]
        %v390 = vld [vmem:[%s368 + $0x30] sm:$0xff]
        %v391 = vld [vmem:[%s368 + $0x38] sm:$0xff]
        %v392 = vld [vmem:[%s368 + $0x40] sm:$0xff]
        %v393 = vld [vmem:[%s368 + $0x48] sm:$0xff]
        %v394 = vld [vmem:[%s368 + $0x50] sm:$0xff]
        %v395 = vld [vmem:[%s368 + $0x58] sm:$0xff]
        %v396 = vld [vmem:[%s368 + $0x60] sm:$0xff]
        %v397 = vld [vmem:[%s368 + $0x68] sm:$0xff]
        %v398 = vld [vmem:[%s368 + $0x70] sm:$0xff]
        %v399 = vld [vmem:[%s368 + $0x78] sm:$0xff]
        %v400 = vld [vmem:[%s368 + $0x80] sm:$0xff]
        %v401 = vld [vmem:[%s368 + $0x88] sm:$0xff]
        %v402 = vld [vmem:[%s368 + $0x90] sm:$0xff]
        %v403 = vld [vmem:[%s368 + $0x98] sm:$0xff]
        %v404 = vld [vmem:[%s368 + $0xa0] sm:$0xff]
        %v405 = vld [vmem:[%s368 + $0xa8] sm:$0xff]
        %v406 = vld [vmem:[%s368 + $0xb0] sm:$0xff]
        %v407 = vld [vmem:[%s368 + $0xb8] sm:$0xff]
        %v408 = vld [vmem:[%s368 + $0xc0] sm:$0xff]
        %v409 = vld [vmem:[%s368 + $0xc8] sm:$0xff]
        %v410 = vld [vmem:[%s368 + $0xd0] sm:$0xff]
        %v411 = vld [vmem:[%s368 + $0xd8] sm:$0xff]
        %v412 = vld [vmem:[%s368 + $0xe0] sm:$0xff]
        %v413 = vld [vmem:[%s368 + $0xe8] sm:$0xff]
        %v414 = vld [vmem:[%s368 + $0xf0] sm:$0xff]
        %v415 = vld [vmem:[%s368 + $0xf8] sm:$0xff]
        %417 = vset.pattern.permute.xlu0 0
        %418 = vperm.xlu0 %417, %v384
        %v419 = vpop.permute.xlu0 %418
        %422 = vset.pattern.permute.xlu0 0
        %423 = vperm.xlu0 %422, %v385
        %v424 = vpop.permute.xlu0 %423
        %427 = vset.pattern.permute.xlu0 0
        %428 = vperm.xlu0 %427, %v386
        %v429 = vpop.permute.xlu0 %428
        %432 = vset.pattern.permute.xlu0 0
        %433 = vperm.xlu0 %432, %v387
        %v434 = vpop.permute.xlu0 %433
        %437 = vset.pattern.permute.xlu0 0
        %438 = vperm.xlu0 %437, %v388
        %v439 = vpop.permute.xlu0 %438
        %442 = vset.pattern.permute.xlu0 0
        %443 = vperm.xlu0 %442, %v389
        %v444 = vpop.permute.xlu0 %443
        %447 = vset.pattern.permute.xlu0 0
        %448 = vperm.xlu0 %447, %v390
        %v449 = vpop.permute.xlu0 %448
        %452 = vset.pattern.permute.xlu0 0
        %453 = vperm.xlu0 %452, %v391
        %v454 = vpop.permute.xlu0 %453
        %457 = vset.pattern.permute.xlu0 0
        %458 = vperm.xlu0 %457, %v392
        %v459 = vpop.permute.xlu0 %458
        %462 = vset.pattern.permute.xlu0 0
        %463 = vperm.xlu0 %462, %v393
        %v464 = vpop.permute.xlu0 %463
        %467 = vset.pattern.permute.xlu0 0
        %468 = vperm.xlu0 %467, %v394
        %v469 = vpop.permute.xlu0 %468
        %472 = vset.pattern.permute.xlu0 0
        %473 = vperm.xlu0 %472, %v395
        %v474 = vpop.permute.xlu0 %473
        %477 = vset.pattern.permute.xlu0 0
        %478 = vperm.xlu0 %477, %v396
        %v479 = vpop.permute.xlu0 %478
        %482 = vset.pattern.permute.xlu0 0
        %483 = vperm.xlu0 %482, %v397
        %v484 = vpop.permute.xlu0 %483
        %487 = vset.pattern.permute.xlu0 0
        %488 = vperm.xlu0 %487, %v398
        %v489 = vpop.permute.xlu0 %488
        %492 = vset.pattern.permute.xlu0 0
        %493 = vperm.xlu0 %492, %v399
        %v494 = vpop.permute.xlu0 %493
        %497 = vset.pattern.permute.xlu0 0
        %498 = vperm.xlu0 %497, %v400
        %v499 = vpop.permute.xlu0 %498
        %502 = vset.pattern.permute.xlu0 0
        %503 = vperm.xlu0 %502, %v401
        %v504 = vpop.permute.xlu0 %503
        %507 = vset.pattern.permute.xlu0 0
        %508 = vperm.xlu0 %507, %v402
        %v509 = vpop.permute.xlu0 %508
        %512 = vset.pattern.permute.xlu0 0
        %513 = vperm.xlu0 %512, %v403
        %v514 = vpop.permute.xlu0 %513
        %517 = vset.pattern.permute.xlu0 0
        %518 = vperm.xlu0 %517, %v404
        %v519 = vpop.permute.xlu0 %518
        %522 = vset.pattern.permute.xlu0 0
        %523 = vperm.xlu0 %522, %v405
        %v524 = vpop.permute.xlu0 %523
        %527 = vset.pattern.permute.xlu0 0
        %528 = vperm.xlu0 %527, %v406
        %v529 = vpop.permute.xlu0 %528
        %532 = vset.pattern.permute.xlu0 0
        %533 = vperm.xlu0 %532, %v407
        %v534 = vpop.permute.xlu0 %533
        %537 = vset.pattern.permute.xlu0 0
        %538 = vperm.xlu0 %537, %v408
        %v539 = vpop.permute.xlu0 %538
        %542 = vset.pattern.permute.xlu0 0
        %543 = vperm.xlu0 %542, %v409
        %v544 = vpop.permute.xlu0 %543
        %547 = vset.pattern.permute.xlu0 0
        %548 = vperm.xlu0 %547, %v410
        %v549 = vpop.permute.xlu0 %548
        %552 = vset.pattern.permute.xlu0 0
        %553 = vperm.xlu0 %552, %v411
        %v554 = vpop.permute.xlu0 %553
        %557 = vset.pattern.permute.xlu0 0
        %558 = vperm.xlu0 %557, %v412
        %v559 = vpop.permute.xlu0 %558
        %562 = vset.pattern.permute.xlu0 0
        %563 = vperm.xlu0 %562, %v413
        %v564 = vpop.permute.xlu0 %563
        %567 = vset.pattern.permute.xlu0 0
        %568 = vperm.xlu0 %567, %v414
        %v569 = vpop.permute.xlu0 %568
        %572 = vset.pattern.permute.xlu0 0
        %573 = vperm.xlu0 %572, %v415
        %v574 = vpop.permute.xlu0 %573
        %v576 = vlaneseq
        %v577 = vshrl.u32 %v576, 7
        %v578 = vsub.s32 0, %v577
        %v579 = vrot.slane %v377, %v578
        %v580 = vmul.f32 %v419, %v579
        %v581 = vmul.f32 %v424, %v579
        %v582 = vmul.f32 %v429, %v579
        %v583 = vmul.f32 %v434, %v579
        %v584 = vmul.f32 %v439, %v579
        %v585 = vmul.f32 %v444, %v579
        %v586 = vmul.f32 %v449, %v579
        %v587 = vmul.f32 %v454, %v579
        %v588 = vmul.f32 %v459, %v579
        %v589 = vmul.f32 %v464, %v579
        %v590 = vmul.f32 %v469, %v579
        %v591 = vmul.f32 %v474, %v579
        %v592 = vmul.f32 %v479, %v579
        %v593 = vmul.f32 %v484, %v579
        %v594 = vmul.f32 %v489, %v579
        %v595 = vmul.f32 %v494, %v579
        %v596 = vmul.f32 %v499, %v579
        %v597 = vmul.f32 %v504, %v579
        %v598 = vmul.f32 %v509, %v579
        %v599 = vmul.f32 %v514, %v579
        %v600 = vmul.f32 %v519, %v579
        %v601 = vmul.f32 %v524, %v579
        %v602 = vmul.f32 %v529, %v579
        %v603 = vmul.f32 %v534, %v579
        %v604 = vmul.f32 %v539, %v579
        %v605 = vmul.f32 %v544, %v579
        %v606 = vmul.f32 %v549, %v579
        %v607 = vmul.f32 %v554, %v579
        %v608 = vmul.f32 %v559, %v579
        %v609 = vmul.f32 %v564, %v579
        %v610 = vmul.f32 %v569, %v579
        %v611 = vmul.f32 %v574, %v579
        %612 = vset.pattern.permute.xlu0 1
        %613 = vperm.xlu0 %612, %v384
        %v614 = vpop.permute.xlu0 %613
        %616 = vset.pattern.permute.xlu0 1
        %617 = vperm.xlu0 %616, %v385
        %v618 = vpop.permute.xlu0 %617
        %620 = vset.pattern.permute.xlu0 1
        %621 = vperm.xlu0 %620, %v386
        %v622 = vpop.permute.xlu0 %621
        %624 = vset.pattern.permute.xlu0 1
        %625 = vperm.xlu0 %624, %v387
        %v626 = vpop.permute.xlu0 %625
        %628 = vset.pattern.permute.xlu0 1
        %629 = vperm.xlu0 %628, %v388
        %v630 = vpop.permute.xlu0 %629
        %632 = vset.pattern.permute.xlu0 1
        %633 = vperm.xlu0 %632, %v389
        %v634 = vpop.permute.xlu0 %633
        %636 = vset.pattern.permute.xlu0 1
        %637 = vperm.xlu0 %636, %v390
        %v638 = vpop.permute.xlu0 %637
        %640 = vset.pattern.permute.xlu0 1
        %641 = vperm.xlu0 %640, %v391
        %v642 = vpop.permute.xlu0 %641
        %644 = vset.pattern.permute.xlu0 1
        %645 = vperm.xlu0 %644, %v392
        %v646 = vpop.permute.xlu0 %645
        %648 = vset.pattern.permute.xlu0 1
        %649 = vperm.xlu0 %648, %v393
        %v650 = vpop.permute.xlu0 %649
        %652 = vset.pattern.permute.xlu0 1
        %653 = vperm.xlu0 %652, %v394
        %v654 = vpop.permute.xlu0 %653
        %656 = vset.pattern.permute.xlu0 1
        %657 = vperm.xlu0 %656, %v395
        %v658 = vpop.permute.xlu0 %657
        %660 = vset.pattern.permute.xlu0 1
        %661 = vperm.xlu0 %660, %v396
        %v662 = vpop.permute.xlu0 %661
        %664 = vset.pattern.permute.xlu0 1
        %665 = vperm.xlu0 %664, %v397
        %v666 = vpop.permute.xlu0 %665
        %668 = vset.pattern.permute.xlu0 1
        %669 = vperm.xlu0 %668, %v398
        %v670 = vpop.permute.xlu0 %669
        %672 = vset.pattern.permute.xlu0 1
        %673 = vperm.xlu0 %672, %v399
        %v674 = vpop.permute.xlu0 %673
        %676 = vset.pattern.permute.xlu0 1
        %677 = vperm.xlu0 %676, %v400
        %v678 = vpop.permute.xlu0 %677
        %680 = vset.pattern.permute.xlu0 1
        %681 = vperm.xlu0 %680, %v401
        %v682 = vpop.permute.xlu0 %681
        %684 = vset.pattern.permute.xlu0 1
        %685 = vperm.xlu0 %684, %v402
        %v686 = vpop.permute.xlu0 %685
        %688 = vset.pattern.permute.xlu0 1
        %689 = vperm.xlu0 %688, %v403
        %v690 = vpop.permute.xlu0 %689
        %692 = vset.pattern.permute.xlu0 1
        %693 = vperm.xlu0 %692, %v404
        %v694 = vpop.permute.xlu0 %693
        %696 = vset.pattern.permute.xlu0 1
        %697 = vperm.xlu0 %696, %v405
        %v698 = vpop.permute.xlu0 %697
        %700 = vset.pattern.permute.xlu0 1
        %701 = vperm.xlu0 %700, %v406
        %v702 = vpop.permute.xlu0 %701
        %704 = vset.pattern.permute.xlu0 1
        %705 = vperm.xlu0 %704, %v407
        %v706 = vpop.permute.xlu0 %705
        %708 = vset.pattern.permute.xlu0 1
        %709 = vperm.xlu0 %708, %v408
        %v710 = vpop.permute.xlu0 %709
        %712 = vset.pattern.permute.xlu0 1
        %713 = vperm.xlu0 %712, %v409
        %v714 = vpop.permute.xlu0 %713
        %716 = vset.pattern.permute.xlu0 1
        %717 = vperm.xlu0 %716, %v410
        %v718 = vpop.permute.xlu0 %717
        %720 = vset.pattern.permute.xlu0 1
        %721 = vperm.xlu0 %720, %v411
        %v722 = vpop.permute.xlu0 %721
        %724 = vset.pattern.permute.xlu0 1
        %725 = vperm.xlu0 %724, %v412
        %v726 = vpop.permute.xlu0 %725
        %728 = vset.pattern.permute.xlu0 1
        %729 = vperm.xlu0 %728, %v413
        %v730 = vpop.permute.xlu0 %729
        %732 = vset.pattern.permute.xlu0 1
        %733 = vperm.xlu0 %732, %v414
        %v734 = vpop.permute.xlu0 %733
        %736 = vset.pattern.permute.xlu0 1
        %737 = vperm.xlu0 %736, %v415
        %v738 = vpop.permute.xlu0 %737
        %v740 = vlaneseq
        %v741 = vshrl.u32 %v740, 7
        %v742 = vsub.s32 1, %v741
        %v743 = vrot.slane %v377, %v742
        %v744 = vmul.f32 %v614, %v743
        %v745 = vmul.f32 %v618, %v743
        %v746 = vmul.f32 %v622, %v743
        %v747 = vmul.f32 %v626, %v743
        %v748 = vmul.f32 %v630, %v743
        %v749 = vmul.f32 %v634, %v743
        %v750 = vmul.f32 %v638, %v743
        %v751 = vmul.f32 %v642, %v743
        %v752 = vmul.f32 %v646, %v743
        %v753 = vmul.f32 %v650, %v743
        %v754 = vmul.f32 %v654, %v743
        %v755 = vmul.f32 %v658, %v743
        %v756 = vmul.f32 %v662, %v743
        %v757 = vmul.f32 %v666, %v743
        %v758 = vmul.f32 %v670, %v743
        %v759 = vmul.f32 %v674, %v743
        %v760 = vmul.f32 %v678, %v743
        %v761 = vmul.f32 %v682, %v743
        %v762 = vmul.f32 %v686, %v743
        %v763 = vmul.f32 %v690, %v743
        %v764 = vmul.f32 %v694, %v743
        %v765 = vmul.f32 %v698, %v743
        %v766 = vmul.f32 %v702, %v743
        %v767 = vmul.f32 %v706, %v743
        %v768 = vmul.f32 %v710, %v743
        %v769 = vmul.f32 %v714, %v743
        %v770 = vmul.f32 %v718, %v743
        %v771 = vmul.f32 %v722, %v743
        %v772 = vmul.f32 %v726, %v743
        %v773 = vmul.f32 %v730, %v743
        %v774 = vmul.f32 %v734, %v743
        %v775 = vmul.f32 %v738, %v743
        %v776 = vadd.f32 %v580, %v744
        %v777 = vadd.f32 %v581, %v745
        %v778 = vadd.f32 %v582, %v746
        %v779 = vadd.f32 %v583, %v747
        %v780 = vadd.f32 %v584, %v748
        %v781 = vadd.f32 %v585, %v749
        %v782 = vadd.f32 %v586, %v750
        %v783 = vadd.f32 %v587, %v751
        %v784 = vadd.f32 %v588, %v752
        %v785 = vadd.f32 %v589, %v753
        %v786 = vadd.f32 %v590, %v754
        %v787 = vadd.f32 %v591, %v755
        %v788 = vadd.f32 %v592, %v756
        %v789 = vadd.f32 %v593, %v757
        %v790 = vadd.f32 %v594, %v758
        %v791 = vadd.f32 %v595, %v759
        %v792 = vadd.f32 %v596, %v760
        %v793 = vadd.f32 %v597, %v761
        %v794 = vadd.f32 %v598, %v762
        %v795 = vadd.f32 %v599, %v763
        %v796 = vadd.f32 %v600, %v764
        %v797 = vadd.f32 %v601, %v765
        %v798 = vadd.f32 %v602, %v766
        %v799 = vadd.f32 %v603, %v767
        %v800 = vadd.f32 %v604, %v768
        %v801 = vadd.f32 %v605, %v769
        %v802 = vadd.f32 %v606, %v770
        %v803 = vadd.f32 %v607, %v771
        %v804 = vadd.f32 %v608, %v772
        %v805 = vadd.f32 %v609, %v773
        %v806 = vadd.f32 %v610, %v774
        %v807 = vadd.f32 %v611, %v775
        %808 = vset.pattern.permute.xlu0 2
        %809 = vperm.xlu0 %808, %v384
        %v810 = vpop.permute.xlu0 %809
        %812 = vset.pattern.permute.xlu0 2
        %813 = vperm.xlu0 %812, %v385
        %v814 = vpop.permute.xlu0 %813
        %816 = vset.pattern.permute.xlu0 2
        %817 = vperm.xlu0 %816, %v386
        %v818 = vpop.permute.xlu0 %817
        %820 = vset.pattern.permute.xlu0 2
        %821 = vperm.xlu0 %820, %v387
        %v822 = vpop.permute.xlu0 %821
        %824 = vset.pattern.permute.xlu0 2
        %825 = vperm.xlu0 %824, %v388
        %v826 = vpop.permute.xlu0 %825
        %828 = vset.pattern.permute.xlu0 2
        %829 = vperm.xlu0 %828, %v389
        %v830 = vpop.permute.xlu0 %829
        %832 = vset.pattern.permute.xlu0 2
        %833 = vperm.xlu0 %832, %v390
        %v834 = vpop.permute.xlu0 %833
        %836 = vset.pattern.permute.xlu0 2
        %837 = vperm.xlu0 %836, %v391
        %v838 = vpop.permute.xlu0 %837
        %840 = vset.pattern.permute.xlu0 2
        %841 = vperm.xlu0 %840, %v392
        %v842 = vpop.permute.xlu0 %841
        %844 = vset.pattern.permute.xlu0 2
        %845 = vperm.xlu0 %844, %v393
        %v846 = vpop.permute.xlu0 %845
        %848 = vset.pattern.permute.xlu0 2
        %849 = vperm.xlu0 %848, %v394
        %v850 = vpop.permute.xlu0 %849
        %852 = vset.pattern.permute.xlu0 2
        %853 = vperm.xlu0 %852, %v395
        %v854 = vpop.permute.xlu0 %853
        %856 = vset.pattern.permute.xlu0 2
        %857 = vperm.xlu0 %856, %v396
        %v858 = vpop.permute.xlu0 %857
        %860 = vset.pattern.permute.xlu0 2
        %861 = vperm.xlu0 %860, %v397
        %v862 = vpop.permute.xlu0 %861
        %864 = vset.pattern.permute.xlu0 2
        %865 = vperm.xlu0 %864, %v398
        %v866 = vpop.permute.xlu0 %865
        %868 = vset.pattern.permute.xlu0 2
        %869 = vperm.xlu0 %868, %v399
        %v870 = vpop.permute.xlu0 %869
        %872 = vset.pattern.permute.xlu0 2
        %873 = vperm.xlu0 %872, %v400
        %v874 = vpop.permute.xlu0 %873
        %876 = vset.pattern.permute.xlu0 2
        %877 = vperm.xlu0 %876, %v401
        %v878 = vpop.permute.xlu0 %877
        %880 = vset.pattern.permute.xlu0 2
        %881 = vperm.xlu0 %880, %v402
        %v882 = vpop.permute.xlu0 %881
        %884 = vset.pattern.permute.xlu0 2
        %885 = vperm.xlu0 %884, %v403
        %v886 = vpop.permute.xlu0 %885
        %888 = vset.pattern.permute.xlu0 2
        %889 = vperm.xlu0 %888, %v404
        %v890 = vpop.permute.xlu0 %889
        %892 = vset.pattern.permute.xlu0 2
        %893 = vperm.xlu0 %892, %v405
        %v894 = vpop.permute.xlu0 %893
        %896 = vset.pattern.permute.xlu0 2
        %897 = vperm.xlu0 %896, %v406
        %v898 = vpop.permute.xlu0 %897
        %900 = vset.pattern.permute.xlu0 2
        %901 = vperm.xlu0 %900, %v407
        %v902 = vpop.permute.xlu0 %901
        %904 = vset.pattern.permute.xlu0 2
        %905 = vperm.xlu0 %904, %v408
        %v906 = vpop.permute.xlu0 %905
        %908 = vset.pattern.permute.xlu0 2
        %909 = vperm.xlu0 %908, %v409
        %v910 = vpop.permute.xlu0 %909
        %912 = vset.pattern.permute.xlu0 2
        %913 = vperm.xlu0 %912, %v410
        %v914 = vpop.permute.xlu0 %913
        %916 = vset.pattern.permute.xlu0 2
        %917 = vperm.xlu0 %916, %v411
        %v918 = vpop.permute.xlu0 %917
        %920 = vset.pattern.permute.xlu0 2
        %921 = vperm.xlu0 %920, %v412
        %v922 = vpop.permute.xlu0 %921
        %924 = vset.pattern.permute.xlu0 2
        %925 = vperm.xlu0 %924, %v413
        %v926 = vpop.permute.xlu0 %925
        %928 = vset.pattern.permute.xlu0 2
        %929 = vperm.xlu0 %928, %v414
        %v930 = vpop.permute.xlu0 %929
        %932 = vset.pattern.permute.xlu0 2
        %933 = vperm.xlu0 %932, %v415
        %v934 = vpop.permute.xlu0 %933
        %v936 = vlaneseq
        %v937 = vshrl.u32 %v936, 7
        %v938 = vsub.s32 2, %v937
        %v939 = vrot.slane %v377, %v938
        %v940 = vmul.f32 %v810, %v939
        %v941 = vmul.f32 %v814, %v939
        %v942 = vmul.f32 %v818, %v939
        %v943 = vmul.f32 %v822, %v939
        %v944 = vmul.f32 %v826, %v939
        %v945 = vmul.f32 %v830, %v939
        %v946 = vmul.f32 %v834, %v939
        %v947 = vmul.f32 %v838, %v939
        %v948 = vmul.f32 %v842, %v939
        %v949 = vmul.f32 %v846, %v939
        %v950 = vmul.f32 %v850, %v939
        %v951 = vmul.f32 %v854, %v939
        %v952 = vmul.f32 %v858, %v939
        %v953 = vmul.f32 %v862, %v939
        %v954 = vmul.f32 %v866, %v939
        %v955 = vmul.f32 %v870, %v939
        %v956 = vmul.f32 %v874, %v939
        %v957 = vmul.f32 %v878, %v939
        %v958 = vmul.f32 %v882, %v939
        %v959 = vmul.f32 %v886, %v939
        %v960 = vmul.f32 %v890, %v939
        %v961 = vmul.f32 %v894, %v939
        %v962 = vmul.f32 %v898, %v939
        %v963 = vmul.f32 %v902, %v939
        %v964 = vmul.f32 %v906, %v939
        %v965 = vmul.f32 %v910, %v939
        %v966 = vmul.f32 %v914, %v939
        %v967 = vmul.f32 %v918, %v939
        %v968 = vmul.f32 %v922, %v939
        %v969 = vmul.f32 %v926, %v939
        %v970 = vmul.f32 %v930, %v939
        %v971 = vmul.f32 %v934, %v939
        %v972 = vadd.f32 %v776, %v940
        %v973 = vadd.f32 %v777, %v941
        %v974 = vadd.f32 %v778, %v942
        %v975 = vadd.f32 %v779, %v943
        %v976 = vadd.f32 %v780, %v944
        %v977 = vadd.f32 %v781, %v945
        %v978 = vadd.f32 %v782, %v946
        %v979 = vadd.f32 %v783, %v947
        %v980 = vadd.f32 %v784, %v948
        %v981 = vadd.f32 %v785, %v949
        %v982 = vadd.f32 %v786, %v950
        %v983 = vadd.f32 %v787, %v951
        %v984 = vadd.f32 %v788, %v952
        %v985 = vadd.f32 %v789, %v953
        %v986 = vadd.f32 %v790, %v954
        %v987 = vadd.f32 %v791, %v955
        %v988 = vadd.f32 %v792, %v956
        %v989 = vadd.f32 %v793, %v957
        %v990 = vadd.f32 %v794, %v958
        %v991 = vadd.f32 %v795, %v959
        %v992 = vadd.f32 %v796, %v960
        %v993 = vadd.f32 %v797, %v961
        %v994 = vadd.f32 %v798, %v962
        %v995 = vadd.f32 %v799, %v963
        %v996 = vadd.f32 %v800, %v964
        %v997 = vadd.f32 %v801, %v965
        %v998 = vadd.f32 %v802, %v966
        %v999 = vadd.f32 %v803, %v967
        %v1000 = vadd.f32 %v804, %v968
        %v1001 = vadd.f32 %v805, %v969
        %v1002 = vadd.f32 %v806, %v970
        %v1003 = vadd.f32 %v807, %v971
        %v1005 = vlaneseq
        %v1006 = vshrl.u32 %v1005, 7
        %v1007 = vsub.s32 0, %v1006
        %v1008 = vrot.slane %v378, %v1007
        %v1010 = vadd.f32 %v972, %v1008
        %v1011 = vadd.f32 %v973, %v1008
        %v1012 = vadd.f32 %v974, %v1008
        %v1013 = vadd.f32 %v975, %v1008
        %v1014 = vadd.f32 %v976, %v1008
        %v1015 = vadd.f32 %v977, %v1008
        %v1016 = vadd.f32 %v978, %v1008
        %v1017 = vadd.f32 %v979, %v1008
        %v1018 = vadd.f32 %v980, %v1008
        %v1019 = vadd.f32 %v981, %v1008
        %v1020 = vadd.f32 %v982, %v1008
        %v1021 = vadd.f32 %v983, %v1008
        %v1022 = vadd.f32 %v984, %v1008
        %v1023 = vadd.f32 %v985, %v1008
        %v1024 = vadd.f32 %v986, %v1008
        %v1025 = vadd.f32 %v987, %v1008
        %v1026 = vadd.f32 %v988, %v1008
        %v1027 = vadd.f32 %v989, %v1008
        %v1028 = vadd.f32 %v990, %v1008
        %v1029 = vadd.f32 %v991, %v1008
        %v1030 = vadd.f32 %v992, %v1008
        %v1031 = vadd.f32 %v993, %v1008
        %v1032 = vadd.f32 %v994, %v1008
        %v1033 = vadd.f32 %v995, %v1008
        %v1034 = vadd.f32 %v996, %v1008
        %v1035 = vadd.f32 %v997, %v1008
        %v1036 = vadd.f32 %v998, %v1008
        %v1037 = vadd.f32 %v999, %v1008
        %v1038 = vadd.f32 %v1000, %v1008
        %v1039 = vadd.f32 %v1001, %v1008
        %v1040 = vadd.f32 %v1002, %v1008
        %v1041 = vadd.f32 %v1003, %v1008
        %v1042 = vmax.f32 %v1010, 0.0
        %v1043 = vmax.f32 %v1011, 0.0
        %v1044 = vmax.f32 %v1012, 0.0
        %v1045 = vmax.f32 %v1013, 0.0
        %v1046 = vmax.f32 %v1014, 0.0
        %v1047 = vmax.f32 %v1015, 0.0
        %v1048 = vmax.f32 %v1016, 0.0
        %v1049 = vmax.f32 %v1017, 0.0
        %v1050 = vmax.f32 %v1018, 0.0
        %v1051 = vmax.f32 %v1019, 0.0
        %v1052 = vmax.f32 %v1020, 0.0
        %v1053 = vmax.f32 %v1021, 0.0
        %v1054 = vmax.f32 %v1022, 0.0
        %v1055 = vmax.f32 %v1023, 0.0
        %v1056 = vmax.f32 %v1024, 0.0
        %v1057 = vmax.f32 %v1025, 0.0
        %v1058 = vmax.f32 %v1026, 0.0
        %v1059 = vmax.f32 %v1027, 0.0
        %v1060 = vmax.f32 %v1028, 0.0
        %v1061 = vmax.f32 %v1029, 0.0
        %v1062 = vmax.f32 %v1030, 0.0
        %v1063 = vmax.f32 %v1031, 0.0
        %v1064 = vmax.f32 %v1032, 0.0
        %v1065 = vmax.f32 %v1033, 0.0
        %v1066 = vmax.f32 %v1034, 0.0
        %v1067 = vmax.f32 %v1035, 0.0
        %v1068 = vmax.f32 %v1036, 0.0
        %v1069 = vmax.f32 %v1037, 0.0
        %v1070 = vmax.f32 %v1038, 0.0
        %v1071 = vmax.f32 %v1039, 0.0
        %v1072 = vmax.f32 %v1040, 0.0
        %v1073 = vmax.f32 %v1041, 0.0
        %v1075 = vlaneseq
        %v1076 = vshrl.u32 %v1075, 7
        %v1077 = vsub.s32 0, %v1076
        %v1078 = vrot.slane %v383, %v1077
        %vm1080 = vcmask 261120
        %v1082 = vsel %vm1080, %v1042, 0
        %v1085 = vsel %vm1080, %v1043, 0
        %v1088 = vsel %vm1080, %v1044, 0
        %v1091 = vsel %vm1080, %v1045, 0
        %v1094 = vsel %vm1080, %v1046, 0
        %v1097 = vsel %vm1080, %v1047, 0
        %v1100 = vsel %vm1080, %v1048, 0
        %v1103 = vsel %vm1080, %v1049, 0
        %v1106 = vsel %vm1080, %v1050, 0
        %v1109 = vsel %vm1080, %v1051, 0
        %v1112 = vsel %vm1080, %v1052, 0
        %v1115 = vsel %vm1080, %v1053, 0
        %v1118 = vsel %vm1080, %v1054, 0
        %v1121 = vsel %vm1080, %v1055, 0
        %v1124 = vsel %vm1080, %v1056, 0
        %v1127 = vsel %vm1080, %v1057, 0
        %v1130 = vsel %vm1080, %v1058, 0
        %v1133 = vsel %vm1080, %v1059, 0
        %v1136 = vsel %vm1080, %v1060, 0
        %v1139 = vsel %vm1080, %v1061, 0
        %v1142 = vsel %vm1080, %v1062, 0
        %v1145 = vsel %vm1080, %v1063, 0
        %v1148 = vsel %vm1080, %v1064, 0
        %v1151 = vsel %vm1080, %v1065, 0
        %v1154 = vsel %vm1080, %v1066, 0
        %v1157 = vsel %vm1080, %v1067, 0
        %v1160 = vsel %vm1080, %v1068, 0
        %v1163 = vsel %vm1080, %v1069, 0
        %v1166 = vsel %vm1080, %v1070, 0
        %v1169 = vsel %vm1080, %v1071, 0
        %v1172 = vsel %vm1080, %v1072, 0
        %v1175 = vsel %vm1080, %v1073, 0
        %1177 = vmatprep.subr.mxu0 0.0
        %1178 = vmatpush1.msra.mxu0 %v379
        %1179 = vmatprep.subr.mxu0 0.0
        %1180 = vmatpush1.msra.mxu0 %v380
        %1181 = vmatprep.subr.mxu0 0.0
        %1182 = vmatpush1.msra.mxu0 %v381
        %1183 = vmatprep.subr.mxu0 0.0
        %1184 = vmatpush1.msra.mxu0 %v382
        %1185 = vmatprep.subr.mxu0 0.0
        %1186 = vmatpush1.msra.mxu0 0.0
        %1187 = vmatprep.subr.mxu0 0.0
        %1188 = vmatpush1.msra.mxu0 0.0
        %1189 = vmatprep.subr.mxu0 0.0
        %1190 = vmatpush1.msra.mxu0 0.0
        %1191 = vmatprep.subr.mxu0 0.0
        %1192 = vmatpush1.msra.mxu0 0.0
        %1193 = vmatprep.subr.mxu0 0.0
        %1194 = vmatpush1.msra.mxu0 0.0
        %1195 = vmatprep.subr.mxu0 0.0
        %1196 = vmatpush1.msra.mxu0 0.0
        %1197 = vmatprep.subr.mxu0 0.0
        %1198 = vmatpush1.msra.mxu0 0.0
        %1199 = vmatprep.subr.mxu0 0.0
        %1200 = vmatpush1.msra.mxu0 0.0
        %1201 = vmatprep.subr.mxu0 0.0
        %1202 = vmatpush1.msra.mxu0 0.0
        %1203 = vmatprep.subr.mxu0 0.0
        %1204 = vmatpush1.msra.mxu0 0.0
        %1205 = vmatprep.subr.mxu0 0.0
        %1206 = vmatpush1.msra.mxu0 0.0
        %1207 = vmatprep.subr.mxu0 0.0
        %1208 = vmatpush1.msra.mxu0 0.0
        %1209 = vmatprep.subr.mxu0 0.0
        %1210 = vmatpush1.msra.mxu0 0.0
        %1211 = vmatprep.subr.mxu0 0.0
        %1212 = vmatpush1.msra.mxu0 0.0
        %1213 = vmatprep.subr.mxu0 0.0
        %1214 = vmatpush1.msra.mxu0 0.0
        %1215 = vmatprep.subr.mxu0 0.0
        %1216 = vmatpush1.msra.mxu0 0.0
        %1217 = vmatprep.subr.mxu0 0.0
        %1218 = vmatpush1.msra.mxu0 0.0
        %1219 = vmatprep.subr.mxu0 0.0
        %1220 = vmatpush1.msra.mxu0 0.0
        %1221 = vmatprep.subr.mxu0 0.0
        %1222 = vmatpush1.msra.mxu0 0.0
        %1223 = vmatprep.subr.mxu0 0.0
        %1224 = vmatpush1.msra.mxu0 0.0
        %1225 = vmatprep.subr.mxu0 0.0
        %1226 = vmatpush1.msra.mxu0 0.0
        %1227 = vmatprep.subr.mxu0 0.0
        %1228 = vmatpush1.msra.mxu0 0.0
        %1229 = vmatprep.subr.mxu0 0.0
        %1230 = vmatpush1.msra.mxu0 0.0
        %1231 = vmatprep.subr.mxu0 0.0
        %1232 = vmatpush1.msra.mxu0 0.0
        %1233 = vmatprep.subr.mxu0 0.0
        %1234 = vmatpush1.msra.mxu0 0.0
        %1235 = vmatprep.subr.mxu0 0.0
        %1236 = vmatpush1.msra.mxu0 0.0
        %1237 = vmatprep.subr.mxu0 0.0
        %1238 = vmatpush1.msra.mxu0 0.0
        %1239 = vmatprep.subr.mxu0 0.0
        %1240 = vmatpush1.msra.mxu0 0.0
        %1241 = vmatprep.mubr.f32.mxu0 0.0
        %1242 = vmatmul.mubr.f32.gmra.mrb[0].mxu0 %v1082
        %v1243 = vpop.f32.mrb[0].mxu0
        %v1244 = vadd.f32 %v1078, %v1243
        %v1245 = vpop.f32.mrb[0].mxu0
        %1246 = vmatprep.mubr.f32.mxu0 0.0
        %1247 = vmatmul.mubr.f32.gmra.mrb[0].mxu0 %v1085
        %v1248 = vpop.f32.mrb[0].mxu0
        %v1249 = vadd.f32 %v1078, %v1248
        %v1250 = vpop.f32.mrb[0].mxu0
        %1251 = vmatprep.mubr.f32.mxu0 0.0
        %1252 = vmatmul.mubr.f32.gmra.mrb[0].mxu0 %v1088
        %v1253 = vpop.f32.mrb[0].mxu0
        %v1254 = vadd.f32 %v1078, %v1253
        %v1255 = vpop.f32.mrb[0].mxu0
        %1256 = vmatprep.mubr.f32.mxu0 0.0
        %1257 = vmatmul.mubr.f32.gmra.mrb[0].mxu0 %v1091
        %v1258 = vpop.f32.mrb[0].mxu0
        %v1259 = vadd.f32 %v1078, %v1258
        %v1260 = vpop.f32.mrb[0].mxu0
        %1261 = vmatprep.mubr.f32.mxu0 0.0
        %1262 = vmatmul.mubr.f32.gmra.mrb[0].mxu0 %v1094
        %v1263 = vpop.f32.mrb[0].mxu0
        %v1264 = vadd.f32 %v1078, %v1263
        %v1265 = vpop.f32.mrb[0].mxu0
        %1266 = vmatprep.mubr.f32.mxu0 0.0
        %1267 = vmatmul.mubr.f32.gmra.mrb[0].mxu0 %v1097
        %v1268 = vpop.f32.mrb[0].mxu0
        %v1269 = vadd.f32 %v1078, %v1268
        %v1270 = vpop.f32.mrb[0].mxu0
        %1271 = vmatprep.mubr.f32.mxu0 0.0
        %1272 = vmatmul.mubr.f32.gmra.mrb[0].mxu0 %v1100
        %v1273 = vpop.f32.mrb[0].mxu0
        %v1274 = vadd.f32 %v1078, %v1273
        %v1275 = vpop.f32.mrb[0].mxu0
        %1276 = vmatprep.mubr.f32.mxu0 0.0
        %1277 = vmatmul.mubr.f32.gmra.mrb[0].mxu0 %v1103
        %v1278 = vpop.f32.mrb[0].mxu0
        %v1279 = vadd.f32 %v1078, %v1278
        %v1280 = vpop.f32.mrb[0].mxu0
        %1281 = vmatprep.mubr.f32.mxu0 0.0
        %1282 = vmatmul.mubr.f32.gmra.mrb[0].mxu0 %v1106
        %v1283 = vpop.f32.mrb[0].mxu0
        %v1284 = vadd.f32 %v1078, %v1283
        %v1285 = vpop.f32.mrb[0].mxu0
        %1286 = vmatprep.mubr.f32.mxu0 0.0
        %1287 = vmatmul.mubr.f32.gmra.mrb[0].mxu0 %v1109
        %v1288 = vpop.f32.mrb[0].mxu0
        %v1289 = vadd.f32 %v1078, %v1288
        %v1290 = vpop.f32.mrb[0].mxu0
        %1291 = vmatprep.mubr.f32.mxu0 0.0
        %1292 = vmatmul.mubr.f32.gmra.mrb[0].mxu0 %v1112
        %v1293 = vpop.f32.mrb[0].mxu0
        %v1294 = vadd.f32 %v1078, %v1293
        %v1295 = vpop.f32.mrb[0].mxu0
        %1296 = vmatprep.mubr.f32.mxu0 0.0
        %1297 = vmatmul.mubr.f32.gmra.mrb[0].mxu0 %v1115
        %v1298 = vpop.f32.mrb[0].mxu0
        %v1299 = vadd.f32 %v1078, %v1298
        %v1300 = vpop.f32.mrb[0].mxu0
        %1301 = vmatprep.mubr.f32.mxu0 0.0
        %1302 = vmatmul.mubr.f32.gmra.mrb[0].mxu0 %v1118
        %v1303 = vpop.f32.mrb[0].mxu0
        %v1304 = vadd.f32 %v1078, %v1303
        %v1305 = vpop.f32.mrb[0].mxu0
        %1306 = vmatprep.mubr.f32.mxu0 0.0
        %1307 = vmatmul.mubr.f32.gmra.mrb[0].mxu0 %v1121
        %v1308 = vpop.f32.mrb[0].mxu0
        %v1309 = vadd.f32 %v1078, %v1308
        %v1310 = vpop.f32.mrb[0].mxu0
        %1311 = vmatprep.mubr.f32.mxu0 0.0
        %1312 = vmatmul.mubr.f32.gmra.mrb[0].mxu0 %v1124
        %v1313 = vpop.f32.mrb[0].mxu0
        %v1314 = vadd.f32 %v1078, %v1313
        %v1315 = vpop.f32.mrb[0].mxu0
        %1316 = vmatprep.mubr.f32.mxu0 0.0
        %1317 = vmatmul.mubr.f32.gmra.mrb[0].mxu0 %v1127
        %v1318 = vpop.f32.mrb[0].mxu0
        %v1319 = vadd.f32 %v1078, %v1318
        %v1320 = vpop.f32.mrb[0].mxu0
        %1321 = vmatprep.mubr.f32.mxu0 0.0
        %1322 = vmatmul.mubr.f32.gmra.mrb[0].mxu0 %v1130
        %v1323 = vpop.f32.mrb[0].mxu0
        %v1324 = vadd.f32 %v1078, %v1323
        %v1325 = vpop.f32.mrb[0].mxu0
        %1326 = vmatprep.mubr.f32.mxu0 0.0
        %1327 = vmatmul.mubr.f32.gmra.mrb[0].mxu0 %v1133
        %v1328 = vpop.f32.mrb[0].mxu0
        %v1329 = vadd.f32 %v1078, %v1328
        %v1330 = vpop.f32.mrb[0].mxu0
        %1331 = vmatprep.mubr.f32.mxu0 0.0
        %1332 = vmatmul.mubr.f32.gmra.mrb[0].mxu0 %v1136
        %v1333 = vpop.f32.mrb[0].mxu0
        %v1334 = vadd.f32 %v1078, %v1333
        %v1335 = vpop.f32.mrb[0].mxu0
        %1336 = vmatprep.mubr.f32.mxu0 0.0
        %1337 = vmatmul.mubr.f32.gmra.mrb[0].mxu0 %v1139
        %v1338 = vpop.f32.mrb[0].mxu0
        %v1339 = vadd.f32 %v1078, %v1338
        %v1340 = vpop.f32.mrb[0].mxu0
        %1341 = vmatprep.mubr.f32.mxu0 0.0
        %1342 = vmatmul.mubr.f32.gmra.mrb[0].mxu0 %v1142
        %v1343 = vpop.f32.mrb[0].mxu0
        %v1344 = vadd.f32 %v1078, %v1343
        %v1345 = vpop.f32.mrb[0].mxu0
        %1346 = vmatprep.mubr.f32.mxu0 0.0
        %1347 = vmatmul.mubr.f32.gmra.mrb[0].mxu0 %v1145
        %v1348 = vpop.f32.mrb[0].mxu0
        %v1349 = vadd.f32 %v1078, %v1348
        %v1350 = vpop.f32.mrb[0].mxu0
        %1351 = vmatprep.mubr.f32.mxu0 0.0
        %1352 = vmatmul.mubr.f32.gmra.mrb[0].mxu0 %v1148
        %v1353 = vpop.f32.mrb[0].mxu0
        %v1354 = vadd.f32 %v1078, %v1353
        %v1355 = vpop.f32.mrb[0].mxu0
        %1356 = vmatprep.mubr.f32.mxu0 0.0
        %1357 = vmatmul.mubr.f32.gmra.mrb[0].mxu0 %v1151
        %v1358 = vpop.f32.mrb[0].mxu0
        %v1359 = vadd.f32 %v1078, %v1358
        %v1360 = vpop.f32.mrb[0].mxu0
        %1361 = vmatprep.mubr.f32.mxu0 0.0
        %1362 = vmatmul.mubr.f32.gmra.mrb[0].mxu0 %v1154
        %v1363 = vpop.f32.mrb[0].mxu0
        %v1364 = vadd.f32 %v1078, %v1363
        %v1365 = vpop.f32.mrb[0].mxu0
        %1366 = vmatprep.mubr.f32.mxu0 0.0
        %1367 = vmatmul.mubr.f32.gmra.mrb[0].mxu0 %v1157
        %v1368 = vpop.f32.mrb[0].mxu0
        %v1369 = vadd.f32 %v1078, %v1368
        %v1370 = vpop.f32.mrb[0].mxu0
        %1371 = vmatprep.mubr.f32.mxu0 0.0
        %1372 = vmatmul.mubr.f32.gmra.mrb[0].mxu0 %v1160
        %v1373 = vpop.f32.mrb[0].mxu0
        %v1374 = vadd.f32 %v1078, %v1373
        %v1375 = vpop.f32.mrb[0].mxu0
        %1376 = vmatprep.mubr.f32.mxu0 0.0
        %1377 = vmatmul.mubr.f32.gmra.mrb[0].mxu0 %v1163
        %v1378 = vpop.f32.mrb[0].mxu0
        %v1379 = vadd.f32 %v1078, %v1378
        %v1380 = vpop.f32.mrb[0].mxu0
        %1381 = vmatprep.mubr.f32.mxu0 0.0
        %1382 = vmatmul.mubr.f32.gmra.mrb[0].mxu0 %v1166
        %v1383 = vpop.f32.mrb[0].mxu0
        %v1384 = vadd.f32 %v1078, %v1383
        %v1385 = vpop.f32.mrb[0].mxu0
        %1386 = vmatprep.mubr.f32.mxu0 0.0
        %1387 = vmatmul.mubr.f32.gmra.mrb[0].mxu0 %v1169
        %v1388 = vpop.f32.mrb[0].mxu0
        %v1389 = vadd.f32 %v1078, %v1388
        %v1390 = vpop.f32.mrb[0].mxu0
        %1391 = vmatprep.mubr.f32.mxu0 0.0
        %1392 = vmatmul.mubr.f32.gmra.mrb[0].mxu0 %v1172
        %v1393 = vpop.f32.mrb[0].mxu0
        %v1394 = vadd.f32 %v1078, %v1393
        %v1395 = vpop.f32.mrb[0].mxu0
        %1396 = vmatprep.mubr.f32.mxu0 0.0
        %1397 = vmatmul.mubr.f32.gmra.mrb[0].mxu0 %v1175
        %v1398 = vpop.f32.mrb[0].mxu0
        %v1399 = vadd.f32 %v1078, %v1398
        %v1400 = vpop.f32.mrb[0].mxu0
        %1401 = vdwg.mxu0
        %v1402 = vmax.f32 %v1244, 0.0
        %v1403 = vmax.f32 %v1249, 0.0
        %v1404 = vmax.f32 %v1254, 0.0
        %v1405 = vmax.f32 %v1259, 0.0
        %v1406 = vmax.f32 %v1264, 0.0
        %v1407 = vmax.f32 %v1269, 0.0
        %v1408 = vmax.f32 %v1274, 0.0
        %v1409 = vmax.f32 %v1279, 0.0
        %v1410 = vmax.f32 %v1284, 0.0
        %v1411 = vmax.f32 %v1289, 0.0
        %v1412 = vmax.f32 %v1294, 0.0
        %v1413 = vmax.f32 %v1299, 0.0
        %v1414 = vmax.f32 %v1304, 0.0
        %v1415 = vmax.f32 %v1309, 0.0
        %v1416 = vmax.f32 %v1314, 0.0
        %v1417 = vmax.f32 %v1319, 0.0
        %v1418 = vmax.f32 %v1324, 0.0
        %v1419 = vmax.f32 %v1329, 0.0
        %v1420 = vmax.f32 %v1334, 0.0
        %v1421 = vmax.f32 %v1339, 0.0
        %v1422 = vmax.f32 %v1344, 0.0
        %v1423 = vmax.f32 %v1349, 0.0
        %v1424 = vmax.f32 %v1354, 0.0
        %v1425 = vmax.f32 %v1359, 0.0
        %v1426 = vmax.f32 %v1364, 0.0
        %v1427 = vmax.f32 %v1369, 0.0
        %v1428 = vmax.f32 %v1374, 0.0
        %v1429 = vmax.f32 %v1379, 0.0
        %v1430 = vmax.f32 %v1384, 0.0
        %v1431 = vmax.f32 %v1389, 0.0
        %v1432 = vmax.f32 %v1394, 0.0
        %v1433 = vmax.f32 %v1399, 0.0
        %v1434 = vadd.f32 %v1402, %v1403
        %v1435 = vadd.f32 %v1434, %v1404
        %v1436 = vadd.f32 %v1435, %v1405
        %v1437 = vadd.f32 %v1436, %v1406
        %v1438 = vadd.f32 %v1437, %v1407
        %v1439 = vadd.f32 %v1438, %v1408
        %v1440 = vadd.f32 %v1439, %v1409
        %v1441 = vadd.f32 %v1440, %v1410
        %v1442 = vadd.f32 %v1441, %v1411
        %v1443 = vadd.f32 %v1442, %v1412
        %v1444 = vadd.f32 %v1443, %v1413
        %v1445 = vadd.f32 %v1444, %v1414
        %v1446 = vadd.f32 %v1445, %v1415
        %v1447 = vadd.f32 %v1446, %v1416
        %v1448 = vadd.f32 %v1447, %v1417
        %v1449 = vadd.f32 %v1448, %v1418
        %v1450 = vadd.f32 %v1449, %v1419
        %v1451 = vadd.f32 %v1450, %v1420
        %v1452 = vadd.f32 %v1451, %v1421
        %v1453 = vadd.f32 %v1452, %v1422
        %v1454 = vadd.f32 %v1453, %v1423
        %v1455 = vadd.f32 %v1454, %v1424
        %v1456 = vadd.f32 %v1455, %v1425
        %v1457 = vadd.f32 %v1456, %v1426
        %v1458 = vadd.f32 %v1457, %v1427
        %v1459 = vadd.f32 %v1458, %v1428
        %v1460 = vadd.f32 %v1459, %v1429
        %v1461 = vadd.f32 %v1460, %v1430
        %v1462 = vadd.f32 %v1461, %v1431
        %v1463 = vadd.f32 %v1462, %v1432
        %v1464 = vadd.f32 %v1463, %v1433
        %v1465 = vrot.slane %v1464, 4
        %v1466 = vadd.f32 %v1464, %v1465
        %v1467 = vrot.slane %v1466, 2
        %v1468 = vadd.f32 %v1466, %v1467
        %v1469 = vrot.slane %v1468, 1
        %v1470 = vadd.f32 %v1468, %v1469
        %s1471 = scalar_lea.vmem %s368, 256
        %v1472 = vld [vmem:[%s1471] sm:$0xff]
        %v1473 = vld [vmem:[%s1471 + $0x8] sm:$0xff]
        %v1474 = vld [vmem:[%s1471 + $0x10] sm:$0xff]
        %v1475 = vld [vmem:[%s1471 + $0x18] sm:$0xff]
        %v1476 = vld [vmem:[%s1471 + $0x20] sm:$0xff]
        %v1477 = vld [vmem:[%s1471 + $0x28] sm:$0xff]
        %v1478 = vld [vmem:[%s1471 + $0x30] sm:$0xff]
        %v1479 = vld [vmem:[%s1471 + $0x38] sm:$0xff]
        %v1480 = vld [vmem:[%s1471 + $0x40] sm:$0xff]
        %v1481 = vld [vmem:[%s1471 + $0x48] sm:$0xff]
        %v1482 = vld [vmem:[%s1471 + $0x50] sm:$0xff]
        %v1483 = vld [vmem:[%s1471 + $0x58] sm:$0xff]
        %v1484 = vld [vmem:[%s1471 + $0x60] sm:$0xff]
        %v1485 = vld [vmem:[%s1471 + $0x68] sm:$0xff]
        %v1486 = vld [vmem:[%s1471 + $0x70] sm:$0xff]
        %v1487 = vld [vmem:[%s1471 + $0x78] sm:$0xff]
        %v1488 = vld [vmem:[%s1471 + $0x80] sm:$0xff]
        %v1489 = vld [vmem:[%s1471 + $0x88] sm:$0xff]
        %v1490 = vld [vmem:[%s1471 + $0x90] sm:$0xff]
        %v1491 = vld [vmem:[%s1471 + $0x98] sm:$0xff]
        %v1492 = vld [vmem:[%s1471 + $0xa0] sm:$0xff]
        %v1493 = vld [vmem:[%s1471 + $0xa8] sm:$0xff]
        %v1494 = vld [vmem:[%s1471 + $0xb0] sm:$0xff]
        %v1495 = vld [vmem:[%s1471 + $0xb8] sm:$0xff]
        %v1496 = vld [vmem:[%s1471 + $0xc0] sm:$0xff]
        %v1497 = vld [vmem:[%s1471 + $0xc8] sm:$0xff]
        %v1498 = vld [vmem:[%s1471 + $0xd0] sm:$0xff]
        %v1499 = vld [vmem:[%s1471 + $0xd8] sm:$0xff]
        %v1500 = vld [vmem:[%s1471 + $0xe0] sm:$0xff]
        %v1501 = vld [vmem:[%s1471 + $0xe8] sm:$0xff]
        %v1502 = vld [vmem:[%s1471 + $0xf0] sm:$0xff]
        %v1503 = vld [vmem:[%s1471 + $0xf8] sm:$0xff]
        %1505 = vset.pattern.permute.xlu0 0
        %1506 = vperm.xlu0 %1505, %v1472
        %v1507 = vpop.permute.xlu0 %1506
        %1510 = vset.pattern.permute.xlu0 0
        %1511 = vperm.xlu0 %1510, %v1473
        %v1512 = vpop.permute.xlu0 %1511
        %1515 = vset.pattern.permute.xlu0 0
        %1516 = vperm.xlu0 %1515, %v1474
        %v1517 = vpop.permute.xlu0 %1516
        %1520 = vset.pattern.permute.xlu0 0
        %1521 = vperm.xlu0 %1520, %v1475
        %v1522 = vpop.permute.xlu0 %1521
        %1525 = vset.pattern.permute.xlu0 0
        %1526 = vperm.xlu0 %1525, %v1476
        %v1527 = vpop.permute.xlu0 %1526
        %1530 = vset.pattern.permute.xlu0 0
        %1531 = vperm.xlu0 %1530, %v1477
        %v1532 = vpop.permute.xlu0 %1531
        %1535 = vset.pattern.permute.xlu0 0
        %1536 = vperm.xlu0 %1535, %v1478
        %v1537 = vpop.permute.xlu0 %1536
        %1540 = vset.pattern.permute.xlu0 0
        %1541 = vperm.xlu0 %1540, %v1479
        %v1542 = vpop.permute.xlu0 %1541
        %1545 = vset.pattern.permute.xlu0 0
        %1546 = vperm.xlu0 %1545, %v1480
        %v1547 = vpop.permute.xlu0 %1546
        %1550 = vset.pattern.permute.xlu0 0
        %1551 = vperm.xlu0 %1550, %v1481
        %v1552 = vpop.permute.xlu0 %1551
        %1555 = vset.pattern.permute.xlu0 0
        %1556 = vperm.xlu0 %1555, %v1482
        %v1557 = vpop.permute.xlu0 %1556
        %1560 = vset.pattern.permute.xlu0 0
        %1561 = vperm.xlu0 %1560, %v1483
        %v1562 = vpop.permute.xlu0 %1561
        %1565 = vset.pattern.permute.xlu0 0
        %1566 = vperm.xlu0 %1565, %v1484
        %v1567 = vpop.permute.xlu0 %1566
        %1570 = vset.pattern.permute.xlu0 0
        %1571 = vperm.xlu0 %1570, %v1485
        %v1572 = vpop.permute.xlu0 %1571
        %1575 = vset.pattern.permute.xlu0 0
        %1576 = vperm.xlu0 %1575, %v1486
        %v1577 = vpop.permute.xlu0 %1576
        %1580 = vset.pattern.permute.xlu0 0
        %1581 = vperm.xlu0 %1580, %v1487
        %v1582 = vpop.permute.xlu0 %1581
        %1585 = vset.pattern.permute.xlu0 0
        %1586 = vperm.xlu0 %1585, %v1488
        %v1587 = vpop.permute.xlu0 %1586
        %1590 = vset.pattern.permute.xlu0 0
        %1591 = vperm.xlu0 %1590, %v1489
        %v1592 = vpop.permute.xlu0 %1591
        %1595 = vset.pattern.permute.xlu0 0
        %1596 = vperm.xlu0 %1595, %v1490
        %v1597 = vpop.permute.xlu0 %1596
        %1600 = vset.pattern.permute.xlu0 0
        %1601 = vperm.xlu0 %1600, %v1491
        %v1602 = vpop.permute.xlu0 %1601
        %1605 = vset.pattern.permute.xlu0 0
        %1606 = vperm.xlu0 %1605, %v1492
        %v1607 = vpop.permute.xlu0 %1606
        %1610 = vset.pattern.permute.xlu0 0
        %1611 = vperm.xlu0 %1610, %v1493
        %v1612 = vpop.permute.xlu0 %1611
        %1615 = vset.pattern.permute.xlu0 0
        %1616 = vperm.xlu0 %1615, %v1494
        %v1617 = vpop.permute.xlu0 %1616
        %1620 = vset.pattern.permute.xlu0 0
        %1621 = vperm.xlu0 %1620, %v1495
        %v1622 = vpop.permute.xlu0 %1621
        %1625 = vset.pattern.permute.xlu0 0
        %1626 = vperm.xlu0 %1625, %v1496
        %v1627 = vpop.permute.xlu0 %1626
        %1630 = vset.pattern.permute.xlu0 0
        %1631 = vperm.xlu0 %1630, %v1497
        %v1632 = vpop.permute.xlu0 %1631
        %1635 = vset.pattern.permute.xlu0 0
        %1636 = vperm.xlu0 %1635, %v1498
        %v1637 = vpop.permute.xlu0 %1636
        %1640 = vset.pattern.permute.xlu0 0
        %1641 = vperm.xlu0 %1640, %v1499
        %v1642 = vpop.permute.xlu0 %1641
        %1645 = vset.pattern.permute.xlu0 0
        %1646 = vperm.xlu0 %1645, %v1500
        %v1647 = vpop.permute.xlu0 %1646
        %1650 = vset.pattern.permute.xlu0 0
        %1651 = vperm.xlu0 %1650, %v1501
        %v1652 = vpop.permute.xlu0 %1651
        %1655 = vset.pattern.permute.xlu0 0
        %1656 = vperm.xlu0 %1655, %v1502
        %v1657 = vpop.permute.xlu0 %1656
        %1660 = vset.pattern.permute.xlu0 0
        %1661 = vperm.xlu0 %1660, %v1503
        %v1662 = vpop.permute.xlu0 %1661
        %v1664 = vmul.f32 %v1507, %v579
        %v1665 = vmul.f32 %v1512, %v579
        %v1666 = vmul.f32 %v1517, %v579
        %v1667 = vmul.f32 %v1522, %v579
        %v1668 = vmul.f32 %v1527, %v579
        %v1669 = vmul.f32 %v1532, %v579
        %v1670 = vmul.f32 %v1537, %v579
        %v1671 = vmul.f32 %v1542, %v579
        %v1672 = vmul.f32 %v1547, %v579
        %v1673 = vmul.f32 %v1552, %v579
        %v1674 = vmul.f32 %v1557, %v579
        %v1675 = vmul.f32 %v1562, %v579
        %v1676 = vmul.f32 %v1567, %v579
        %v1677 = vmul.f32 %v1572, %v579
        %v1678 = vmul.f32 %v1577, %v579
        %v1679 = vmul.f32 %v1582, %v579
        %v1680 = vmul.f32 %v1587, %v579
        %v1681 = vmul.f32 %v1592, %v579
        %v1682 = vmul.f32 %v1597, %v579
        %v1683 = vmul.f32 %v1602, %v579
        %v1684 = vmul.f32 %v1607, %v579
        %v1685 = vmul.f32 %v1612, %v579
        %v1686 = vmul.f32 %v1617, %v579
        %v1687 = vmul.f32 %v1622, %v579
        %v1688 = vmul.f32 %v1627, %v579
        %v1689 = vmul.f32 %v1632, %v579
        %v1690 = vmul.f32 %v1637, %v579
        %v1691 = vmul.f32 %v1642, %v579
        %v1692 = vmul.f32 %v1647, %v579
        %v1693 = vmul.f32 %v1652, %v579
        %v1694 = vmul.f32 %v1657, %v579
        %v1695 = vmul.f32 %v1662, %v579
        %1696 = vset.pattern.permute.xlu0 1
        %1697 = vperm.xlu0 %1696, %v1472
        %v1698 = vpop.permute.xlu0 %1697
        %1700 = vset.pattern.permute.xlu0 1
        %1701 = vperm.xlu0 %1700, %v1473
        %v1702 = vpop.permute.xlu0 %1701
        %1704 = vset.pattern.permute.xlu0 1
        %1705 = vperm.xlu0 %1704, %v1474
        %v1706 = vpop.permute.xlu0 %1705
        %1708 = vset.pattern.permute.xlu0 1
        %1709 = vperm.xlu0 %1708, %v1475
        %v1710 = vpop.permute.xlu0 %1709
        %1712 = vset.pattern.permute.xlu0 1
        %1713 = vperm.xlu0 %1712, %v1476
        %v1714 = vpop.permute.xlu0 %1713
        %1716 = vset.pattern.permute.xlu0 1
        %1717 = vperm.xlu0 %1716, %v1477
        %v1718 = vpop.permute.xlu0 %1717
        %1720 = vset.pattern.permute.xlu0 1
        %1721 = vperm.xlu0 %1720, %v1478
        %v1722 = vpop.permute.xlu0 %1721
        %1724 = vset.pattern.permute.xlu0 1
        %1725 = vperm.xlu0 %1724, %v1479
        %v1726 = vpop.permute.xlu0 %1725
        %1728 = vset.pattern.permute.xlu0 1
        %1729 = vperm.xlu0 %1728, %v1480
        %v1730 = vpop.permute.xlu0 %1729
        %1732 = vset.pattern.permute.xlu0 1
        %1733 = vperm.xlu0 %1732, %v1481
        %v1734 = vpop.permute.xlu0 %1733
        %1736 = vset.pattern.permute.xlu0 1
        %1737 = vperm.xlu0 %1736, %v1482
        %v1738 = vpop.permute.xlu0 %1737
        %1740 = vset.pattern.permute.xlu0 1
        %1741 = vperm.xlu0 %1740, %v1483
        %v1742 = vpop.permute.xlu0 %1741
        %1744 = vset.pattern.permute.xlu0 1
        %1745 = vperm.xlu0 %1744, %v1484
        %v1746 = vpop.permute.xlu0 %1745
        %1748 = vset.pattern.permute.xlu0 1
        %1749 = vperm.xlu0 %1748, %v1485
        %v1750 = vpop.permute.xlu0 %1749
        %1752 = vset.pattern.permute.xlu0 1
        %1753 = vperm.xlu0 %1752, %v1486
        %v1754 = vpop.permute.xlu0 %1753
        %1756 = vset.pattern.permute.xlu0 1
        %1757 = vperm.xlu0 %1756, %v1487
        %v1758 = vpop.permute.xlu0 %1757
        %1760 = vset.pattern.permute.xlu0 1
        %1761 = vperm.xlu0 %1760, %v1488
        %v1762 = vpop.permute.xlu0 %1761
        %1764 = vset.pattern.permute.xlu0 1
        %1765 = vperm.xlu0 %1764, %v1489
        %v1766 = vpop.permute.xlu0 %1765
        %1768 = vset.pattern.permute.xlu0 1
        %1769 = vperm.xlu0 %1768, %v1490
        %v1770 = vpop.permute.xlu0 %1769
        %1772 = vset.pattern.permute.xlu0 1
        %1773 = vperm.xlu0 %1772, %v1491
        %v1774 = vpop.permute.xlu0 %1773
        %1776 = vset.pattern.permute.xlu0 1
        %1777 = vperm.xlu0 %1776, %v1492
        %v1778 = vpop.permute.xlu0 %1777
        %1780 = vset.pattern.permute.xlu0 1
        %1781 = vperm.xlu0 %1780, %v1493
        %v1782 = vpop.permute.xlu0 %1781
        %1784 = vset.pattern.permute.xlu0 1
        %1785 = vperm.xlu0 %1784, %v1494
        %v1786 = vpop.permute.xlu0 %1785
        %1788 = vset.pattern.permute.xlu0 1
        %1789 = vperm.xlu0 %1788, %v1495
        %v1790 = vpop.permute.xlu0 %1789
        %1792 = vset.pattern.permute.xlu0 1
        %1793 = vperm.xlu0 %1792, %v1496
        %v1794 = vpop.permute.xlu0 %1793
        %1796 = vset.pattern.permute.xlu0 1
        %1797 = vperm.xlu0 %1796, %v1497
        %v1798 = vpop.permute.xlu0 %1797
        %1800 = vset.pattern.permute.xlu0 1
        %1801 = vperm.xlu0 %1800, %v1498
        %v1802 = vpop.permute.xlu0 %1801
        %1804 = vset.pattern.permute.xlu0 1
        %1805 = vperm.xlu0 %1804, %v1499
        %v1806 = vpop.permute.xlu0 %1805
        %1808 = vset.pattern.permute.xlu0 1
        %1809 = vperm.xlu0 %1808, %v1500
        %v1810 = vpop.permute.xlu0 %1809
        %1812 = vset.pattern.permute.xlu0 1
        %1813 = vperm.xlu0 %1812, %v1501
        %v1814 = vpop.permute.xlu0 %1813
        %1816 = vset.pattern.permute.xlu0 1
        %1817 = vperm.xlu0 %1816, %v1502
        %v1818 = vpop.permute.xlu0 %1817
        %1820 = vset.pattern.permute.xlu0 1
        %1821 = vperm.xlu0 %1820, %v1503
        %v1822 = vpop.permute.xlu0 %1821
        %v1824 = vmul.f32 %v1698, %v743
        %v1825 = vmul.f32 %v1702, %v743
        %v1826 = vmul.f32 %v1706, %v743
        %v1827 = vmul.f32 %v1710, %v743
        %v1828 = vmul.f32 %v1714, %v743
        %v1829 = vmul.f32 %v1718, %v743
        %v1830 = vmul.f32 %v1722, %v743
        %v1831 = vmul.f32 %v1726, %v743
        %v1832 = vmul.f32 %v1730, %v743
        %v1833 = vmul.f32 %v1734, %v743
        %v1834 = vmul.f32 %v1738, %v743
        %v1835 = vmul.f32 %v1742, %v743
        %v1836 = vmul.f32 %v1746, %v743
        %v1837 = vmul.f32 %v1750, %v743
        %v1838 = vmul.f32 %v1754, %v743
        %v1839 = vmul.f32 %v1758, %v743
        %v1840 = vmul.f32 %v1762, %v743
        %v1841 = vmul.f32 %v1766, %v743
        %v1842 = vmul.f32 %v1770, %v743
        %v1843 = vmul.f32 %v1774, %v743
        %v1844 = vmul.f32 %v1778, %v743
        %v1845 = vmul.f32 %v1782, %v743
        %v1846 = vmul.f32 %v1786, %v743
        %v1847 = vmul.f32 %v1790, %v743
        %v1848 = vmul.f32 %v1794, %v743
        %v1849 = vmul.f32 %v1798, %v743
        %v1850 = vmul.f32 %v1802, %v743
        %v1851 = vmul.f32 %v1806, %v743
        %v1852 = vmul.f32 %v1810, %v743
        %v1853 = vmul.f32 %v1814, %v743
        %v1854 = vmul.f32 %v1818, %v743
        %v1855 = vmul.f32 %v1822, %v743
        %v1856 = vadd.f32 %v1664, %v1824
        %v1857 = vadd.f32 %v1665, %v1825
        %v1858 = vadd.f32 %v1666, %v1826
        %v1859 = vadd.f32 %v1667, %v1827
        %v1860 = vadd.f32 %v1668, %v1828
        %v1861 = vadd.f32 %v1669, %v1829
        %v1862 = vadd.f32 %v1670, %v1830
        %v1863 = vadd.f32 %v1671, %v1831
        %v1864 = vadd.f32 %v1672, %v1832
        %v1865 = vadd.f32 %v1673, %v1833
        %v1866 = vadd.f32 %v1674, %v1834
        %v1867 = vadd.f32 %v1675, %v1835
        %v1868 = vadd.f32 %v1676, %v1836
        %v1869 = vadd.f32 %v1677, %v1837
        %v1870 = vadd.f32 %v1678, %v1838
        %v1871 = vadd.f32 %v1679, %v1839
        %v1872 = vadd.f32 %v1680, %v1840
        %v1873 = vadd.f32 %v1681, %v1841
        %v1874 = vadd.f32 %v1682, %v1842
        %v1875 = vadd.f32 %v1683, %v1843
        %v1876 = vadd.f32 %v1684, %v1844
        %v1877 = vadd.f32 %v1685, %v1845
        %v1878 = vadd.f32 %v1686, %v1846
        %v1879 = vadd.f32 %v1687, %v1847
        %v1880 = vadd.f32 %v1688, %v1848
        %v1881 = vadd.f32 %v1689, %v1849
        %v1882 = vadd.f32 %v1690, %v1850
        %v1883 = vadd.f32 %v1691, %v1851
        %v1884 = vadd.f32 %v1692, %v1852
        %v1885 = vadd.f32 %v1693, %v1853
        %v1886 = vadd.f32 %v1694, %v1854
        %v1887 = vadd.f32 %v1695, %v1855
        %1888 = vset.pattern.permute.xlu0 2
        %1889 = vperm.xlu0 %1888, %v1472
        %v1890 = vpop.permute.xlu0 %1889
        %1892 = vset.pattern.permute.xlu0 2
        %1893 = vperm.xlu0 %1892, %v1473
        %v1894 = vpop.permute.xlu0 %1893
        %1896 = vset.pattern.permute.xlu0 2
        %1897 = vperm.xlu0 %1896, %v1474
        %v1898 = vpop.permute.xlu0 %1897
        %1900 = vset.pattern.permute.xlu0 2
        %1901 = vperm.xlu0 %1900, %v1475
        %v1902 = vpop.permute.xlu0 %1901
        %1904 = vset.pattern.permute.xlu0 2
        %1905 = vperm.xlu0 %1904, %v1476
        %v1906 = vpop.permute.xlu0 %1905
        %1908 = vset.pattern.permute.xlu0 2
        %1909 = vperm.xlu0 %1908, %v1477
        %v1910 = vpop.permute.xlu0 %1909
        %1912 = vset.pattern.permute.xlu0 2
        %1913 = vperm.xlu0 %1912, %v1478
        %v1914 = vpop.permute.xlu0 %1913
        %1916 = vset.pattern.permute.xlu0 2
        %1917 = vperm.xlu0 %1916, %v1479
        %v1918 = vpop.permute.xlu0 %1917
        %1920 = vset.pattern.permute.xlu0 2
        %1921 = vperm.xlu0 %1920, %v1480
        %v1922 = vpop.permute.xlu0 %1921
        %1924 = vset.pattern.permute.xlu0 2
        %1925 = vperm.xlu0 %1924, %v1481
        %v1926 = vpop.permute.xlu0 %1925
        %1928 = vset.pattern.permute.xlu0 2
        %1929 = vperm.xlu0 %1928, %v1482
        %v1930 = vpop.permute.xlu0 %1929
        %1932 = vset.pattern.permute.xlu0 2
        %1933 = vperm.xlu0 %1932, %v1483
        %v1934 = vpop.permute.xlu0 %1933
        %1936 = vset.pattern.permute.xlu0 2
        %1937 = vperm.xlu0 %1936, %v1484
        %v1938 = vpop.permute.xlu0 %1937
        %1940 = vset.pattern.permute.xlu0 2
        %1941 = vperm.xlu0 %1940, %v1485
        %v1942 = vpop.permute.xlu0 %1941
        %1944 = vset.pattern.permute.xlu0 2
        %1945 = vperm.xlu0 %1944, %v1486
        %v1946 = vpop.permute.xlu0 %1945
        %1948 = vset.pattern.permute.xlu0 2
        %1949 = vperm.xlu0 %1948, %v1487
        %v1950 = vpop.permute.xlu0 %1949
        %1952 = vset.pattern.permute.xlu0 2
        %1953 = vperm.xlu0 %1952, %v1488
        %v1954 = vpop.permute.xlu0 %1953
        %1956 = vset.pattern.permute.xlu0 2
        %1957 = vperm.xlu0 %1956, %v1489
        %v1958 = vpop.permute.xlu0 %1957
        %1960 = vset.pattern.permute.xlu0 2
        %1961 = vperm.xlu0 %1960, %v1490
        %v1962 = vpop.permute.xlu0 %1961
        %1964 = vset.pattern.permute.xlu0 2
        %1965 = vperm.xlu0 %1964, %v1491
        %v1966 = vpop.permute.xlu0 %1965
        %1968 = vset.pattern.permute.xlu0 2
        %1969 = vperm.xlu0 %1968, %v1492
        %v1970 = vpop.permute.xlu0 %1969
        %1972 = vset.pattern.permute.xlu0 2
        %1973 = vperm.xlu0 %1972, %v1493
        %v1974 = vpop.permute.xlu0 %1973
        %1976 = vset.pattern.permute.xlu0 2
        %1977 = vperm.xlu0 %1976, %v1494
        %v1978 = vpop.permute.xlu0 %1977
        %1980 = vset.pattern.permute.xlu0 2
        %1981 = vperm.xlu0 %1980, %v1495
        %v1982 = vpop.permute.xlu0 %1981
        %1984 = vset.pattern.permute.xlu0 2
        %1985 = vperm.xlu0 %1984, %v1496
        %v1986 = vpop.permute.xlu0 %1985
        %1988 = vset.pattern.permute.xlu0 2
        %1989 = vperm.xlu0 %1988, %v1497
        %v1990 = vpop.permute.xlu0 %1989
        %1992 = vset.pattern.permute.xlu0 2
        %1993 = vperm.xlu0 %1992, %v1498
        %v1994 = vpop.permute.xlu0 %1993
        %1996 = vset.pattern.permute.xlu0 2
        %1997 = vperm.xlu0 %1996, %v1499
        %v1998 = vpop.permute.xlu0 %1997
        %2000 = vset.pattern.permute.xlu0 2
        %2001 = vperm.xlu0 %2000, %v1500
        %v2002 = vpop.permute.xlu0 %2001
        %2004 = vset.pattern.permute.xlu0 2
        %2005 = vperm.xlu0 %2004, %v1501
        %v2006 = vpop.permute.xlu0 %2005
        %2008 = vset.pattern.permute.xlu0 2
        %2009 = vperm.xlu0 %2008, %v1502
        %v2010 = vpop.permute.xlu0 %2009
        %2012 = vset.pattern.permute.xlu0 2
        %2013 = vperm.xlu0 %2012, %v1503
        %v2014 = vpop.permute.xlu0 %2013
        %v2016 = vmul.f32 %v1890, %v939
        %v2017 = vmul.f32 %v1894, %v939
        %v2018 = vmul.f32 %v1898, %v939
        %v2019 = vmul.f32 %v1902, %v939
        %v2020 = vmul.f32 %v1906, %v939
        %v2021 = vmul.f32 %v1910, %v939
        %v2022 = vmul.f32 %v1914, %v939
        %v2023 = vmul.f32 %v1918, %v939
        %v2024 = vmul.f32 %v1922, %v939
        %v2025 = vmul.f32 %v1926, %v939
        %v2026 = vmul.f32 %v1930, %v939
        %v2027 = vmul.f32 %v1934, %v939
        %v2028 = vmul.f32 %v1938, %v939
        %v2029 = vmul.f32 %v1942, %v939
        %v2030 = vmul.f32 %v1946, %v939
        %v2031 = vmul.f32 %v1950, %v939
        %v2032 = vmul.f32 %v1954, %v939
        %v2033 = vmul.f32 %v1958, %v939
        %v2034 = vmul.f32 %v1962, %v939
        %v2035 = vmul.f32 %v1966, %v939
        %v2036 = vmul.f32 %v1970, %v939
        %v2037 = vmul.f32 %v1974, %v939
        %v2038 = vmul.f32 %v1978, %v939
        %v2039 = vmul.f32 %v1982, %v939
        %v2040 = vmul.f32 %v1986, %v939
        %v2041 = vmul.f32 %v1990, %v939
        %v2042 = vmul.f32 %v1994, %v939
        %v2043 = vmul.f32 %v1998, %v939
        %v2044 = vmul.f32 %v2002, %v939
        %v2045 = vmul.f32 %v2006, %v939
        %v2046 = vmul.f32 %v2010, %v939
        %v2047 = vmul.f32 %v2014, %v939
        %v2048 = vadd.f32 %v1856, %v2016
        %v2049 = vadd.f32 %v1857, %v2017
        %v2050 = vadd.f32 %v1858, %v2018
        %v2051 = vadd.f32 %v1859, %v2019
        %v2052 = vadd.f32 %v1860, %v2020
        %v2053 = vadd.f32 %v1861, %v2021
        %v2054 = vadd.f32 %v1862, %v2022
        %v2055 = vadd.f32 %v1863, %v2023
        %v2056 = vadd.f32 %v1864, %v2024
        %v2057 = vadd.f32 %v1865, %v2025
        %v2058 = vadd.f32 %v1866, %v2026
        %v2059 = vadd.f32 %v1867, %v2027
        %v2060 = vadd.f32 %v1868, %v2028
        %v2061 = vadd.f32 %v1869, %v2029
        %v2062 = vadd.f32 %v1870, %v2030
        %v2063 = vadd.f32 %v1871, %v2031
        %v2064 = vadd.f32 %v1872, %v2032
        %v2065 = vadd.f32 %v1873, %v2033
        %v2066 = vadd.f32 %v1874, %v2034
        %v2067 = vadd.f32 %v1875, %v2035
        %v2068 = vadd.f32 %v1876, %v2036
        %v2069 = vadd.f32 %v1877, %v2037
        %v2070 = vadd.f32 %v1878, %v2038
        %v2071 = vadd.f32 %v1879, %v2039
        %v2072 = vadd.f32 %v1880, %v2040
        %v2073 = vadd.f32 %v1881, %v2041
        %v2074 = vadd.f32 %v1882, %v2042
        %v2075 = vadd.f32 %v1883, %v2043
        %v2076 = vadd.f32 %v1884, %v2044
        %v2077 = vadd.f32 %v1885, %v2045
        %v2078 = vadd.f32 %v1886, %v2046
        %v2079 = vadd.f32 %v1887, %v2047
        %v2080 = vadd.f32 %v2048, %v1008
        %v2081 = vadd.f32 %v2049, %v1008
        %v2082 = vadd.f32 %v2050, %v1008
        %v2083 = vadd.f32 %v2051, %v1008
        %v2084 = vadd.f32 %v2052, %v1008
        %v2085 = vadd.f32 %v2053, %v1008
        %v2086 = vadd.f32 %v2054, %v1008
        %v2087 = vadd.f32 %v2055, %v1008
        %v2088 = vadd.f32 %v2056, %v1008
        %v2089 = vadd.f32 %v2057, %v1008
        %v2090 = vadd.f32 %v2058, %v1008
        %v2091 = vadd.f32 %v2059, %v1008
        %v2092 = vadd.f32 %v2060, %v1008
        %v2093 = vadd.f32 %v2061, %v1008
        %v2094 = vadd.f32 %v2062, %v1008
        %v2095 = vadd.f32 %v2063, %v1008
        %v2096 = vadd.f32 %v2064, %v1008
        %v2097 = vadd.f32 %v2065, %v1008
        %v2098 = vadd.f32 %v2066, %v1008
        %v2099 = vadd.f32 %v2067, %v1008
        %v2100 = vadd.f32 %v2068, %v1008
        %v2101 = vadd.f32 %v2069, %v1008
        %v2102 = vadd.f32 %v2070, %v1008
        %v2103 = vadd.f32 %v2071, %v1008
        %v2104 = vadd.f32 %v2072, %v1008
        %v2105 = vadd.f32 %v2073, %v1008
        %v2106 = vadd.f32 %v2074, %v1008
        %v2107 = vadd.f32 %v2075, %v1008
        %v2108 = vadd.f32 %v2076, %v1008
        %v2109 = vadd.f32 %v2077, %v1008
        %v2110 = vadd.f32 %v2078, %v1008
        %v2111 = vadd.f32 %v2079, %v1008
        %v2112 = vmax.f32 %v2080, 0.0
        %v2113 = vmax.f32 %v2081, 0.0
        %v2114 = vmax.f32 %v2082, 0.0
        %v2115 = vmax.f32 %v2083, 0.0
        %v2116 = vmax.f32 %v2084, 0.0
        %v2117 = vmax.f32 %v2085, 0.0
        %v2118 = vmax.f32 %v2086, 0.0
        %v2119 = vmax.f32 %v2087, 0.0
        %v2120 = vmax.f32 %v2088, 0.0
        %v2121 = vmax.f32 %v2089, 0.0
        %v2122 = vmax.f32 %v2090, 0.0
        %v2123 = vmax.f32 %v2091, 0.0
        %v2124 = vmax.f32 %v2092, 0.0
        %v2125 = vmax.f32 %v2093, 0.0
        %v2126 = vmax.f32 %v2094, 0.0
        %v2127 = vmax.f32 %v2095, 0.0
        %v2128 = vmax.f32 %v2096, 0.0
        %v2129 = vmax.f32 %v2097, 0.0
        %v2130 = vmax.f32 %v2098, 0.0
        %v2131 = vmax.f32 %v2099, 0.0
        %v2132 = vmax.f32 %v2100, 0.0
        %v2133 = vmax.f32 %v2101, 0.0
        %v2134 = vmax.f32 %v2102, 0.0
        %v2135 = vmax.f32 %v2103, 0.0
        %v2136 = vmax.f32 %v2104, 0.0
        %v2137 = vmax.f32 %v2105, 0.0
        %v2138 = vmax.f32 %v2106, 0.0
        %v2139 = vmax.f32 %v2107, 0.0
        %v2140 = vmax.f32 %v2108, 0.0
        %v2141 = vmax.f32 %v2109, 0.0
        %v2142 = vmax.f32 %v2110, 0.0
        %v2143 = vmax.f32 %v2111, 0.0
        %v2145 = vsel %vm1080, %v2112, 0
        %v2148 = vsel %vm1080, %v2113, 0
        %v2151 = vsel %vm1080, %v2114, 0
        %v2154 = vsel %vm1080, %v2115, 0
        %v2157 = vsel %vm1080, %v2116, 0
        %v2160 = vsel %vm1080, %v2117, 0
        %v2163 = vsel %vm1080, %v2118, 0
        %v2166 = vsel %vm1080, %v2119, 0
        %v2169 = vsel %vm1080, %v2120, 0
        %v2172 = vsel %vm1080, %v2121, 0
        %v2175 = vsel %vm1080, %v2122, 0
        %v2178 = vsel %vm1080, %v2123, 0
        %v2181 = vsel %vm1080, %v2124, 0
        %v2184 = vsel %vm1080, %v2125, 0
        %v2187 = vsel %vm1080, %v2126, 0
        %v2190 = vsel %vm1080, %v2127, 0
        %v2193 = vsel %vm1080, %v2128, 0
        %v2196 = vsel %vm1080, %v2129, 0
        %v2199 = vsel %vm1080, %v2130, 0
        %v2202 = vsel %vm1080, %v2131, 0
        %v2205 = vsel %vm1080, %v2132, 0
        %v2208 = vsel %vm1080, %v2133, 0
        %v2211 = vsel %vm1080, %v2134, 0
        %v2214 = vsel %vm1080, %v2135, 0
        %v2217 = vsel %vm1080, %v2136, 0
        %v2220 = vsel %vm1080, %v2137, 0
        %v2223 = vsel %vm1080, %v2138, 0
        %v2226 = vsel %vm1080, %v2139, 0
        %v2229 = vsel %vm1080, %v2140, 0
        %v2232 = vsel %vm1080, %v2141, 0
        %v2235 = vsel %vm1080, %v2142, 0
        %v2238 = vsel %vm1080, %v2143, 0
        %2240 = vmatprep.subr.mxu0 0.0
        %2241 = vmatpush1.msra.mxu0 %v379
        %2242 = vmatprep.subr.mxu0 0.0
        %2243 = vmatpush1.msra.mxu0 %v380
        %2244 = vmatprep.subr.mxu0 0.0
        %2245 = vmatpush1.msra.mxu0 %v381
        %2246 = vmatprep.subr.mxu0 0.0
        %2247 = vmatpush1.msra.mxu0 %v382
        %2248 = vmatprep.subr.mxu0 0.0
        %2249 = vmatpush1.msra.mxu0 0.0
        %2250 = vmatprep.subr.mxu0 0.0
        %2251 = vmatpush1.msra.mxu0 0.0
        %2252 = vmatprep.subr.mxu0 0.0
        %2253 = vmatpush1.msra.mxu0 0.0
        %2254 = vmatprep.subr.mxu0 0.0
        %2255 = vmatpush1.msra.mxu0 0.0
        %2256 = vmatprep.subr.mxu0 0.0
        %2257 = vmatpush1.msra.mxu0 0.0
        %2258 = vmatprep.subr.mxu0 0.0
        %2259 = vmatpush1.msra.mxu0 0.0
        %2260 = vmatprep.subr.mxu0 0.0
        %2261 = vmatpush1.msra.mxu0 0.0
        %2262 = vmatprep.subr.mxu0 0.0
        %2263 = vmatpush1.msra.mxu0 0.0
        %2264 = vmatprep.subr.mxu0 0.0
        %2265 = vmatpush1.msra.mxu0 0.0
        %2266 = vmatprep.subr.mxu0 0.0
        %2267 = vmatpush1.msra.mxu0 0.0
        %2268 = vmatprep.subr.mxu0 0.0
        %2269 = vmatpush1.msra.mxu0 0.0
        %2270 = vmatprep.subr.mxu0 0.0
        %2271 = vmatpush1.msra.mxu0 0.0
        %2272 = vmatprep.subr.mxu0 0.0
        %2273 = vmatpush1.msra.mxu0 0.0
        %2274 = vmatprep.subr.mxu0 0.0
        %2275 = vmatpush1.msra.mxu0 0.0
        %2276 = vmatprep.subr.mxu0 0.0
        %2277 = vmatpush1.msra.mxu0 0.0
        %2278 = vmatprep.subr.mxu0 0.0
        %2279 = vmatpush1.msra.mxu0 0.0
        %2280 = vmatprep.subr.mxu0 0.0
        %2281 = vmatpush1.msra.mxu0 0.0
        %2282 = vmatprep.subr.mxu0 0.0
        %2283 = vmatpush1.msra.mxu0 0.0
        %2284 = vmatprep.subr.mxu0 0.0
        %2285 = vmatpush1.msra.mxu0 0.0
        %2286 = vmatprep.subr.mxu0 0.0
        %2287 = vmatpush1.msra.mxu0 0.0
        %2288 = vmatprep.subr.mxu0 0.0
        %2289 = vmatpush1.msra.mxu0 0.0
        %2290 = vmatprep.subr.mxu0 0.0
        %2291 = vmatpush1.msra.mxu0 0.0
        %2292 = vmatprep.subr.mxu0 0.0
        %2293 = vmatpush1.msra.mxu0 0.0
        %2294 = vmatprep.subr.mxu0 0.0
        %2295 = vmatpush1.msra.mxu0 0.0
        %2296 = vmatprep.subr.mxu0 0.0
        %2297 = vmatpush1.msra.mxu0 0.0
        %2298 = vmatprep.subr.mxu0 0.0
        %2299 = vmatpush1.msra.mxu0 0.0
        %2300 = vmatprep.subr.mxu0 0.0
        %2301 = vmatpush1.msra.mxu0 0.0
        %2302 = vmatprep.subr.mxu0 0.0
        %2303 = vmatpush1.msra.mxu0 0.0
        %2304 = vmatprep.mubr.f32.mxu0 0.0
        %2305 = vmatmul.mubr.f32.gmra.mrb[0].mxu0 %v2145
        %v2306 = vpop.f32.mrb[0].mxu0
        %v2307 = vadd.f32 %v1078, %v2306
        %v2308 = vpop.f32.mrb[0].mxu0
        %2309 = vmatprep.mubr.f32.mxu0 0.0
        %2310 = vmatmul.mubr.f32.gmra.mrb[0].mxu0 %v2148
        %v2311 = vpop.f32.mrb[0].mxu0
        %v2312 = vadd.f32 %v1078, %v2311
        %v2313 = vpop.f32.mrb[0].mxu0
        %2314 = vmatprep.mubr.f32.mxu0 0.0
        %2315 = vmatmul.mubr.f32.gmra.mrb[0].mxu0 %v2151
        %v2316 = vpop.f32.mrb[0].mxu0
        %v2317 = vadd.f32 %v1078, %v2316
        %v2318 = vpop.f32.mrb[0].mxu0
        %2319 = vmatprep.mubr.f32.mxu0 0.0
        %2320 = vmatmul.mubr.f32.gmra.mrb[0].mxu0 %v2154
        %v2321 = vpop.f32.mrb[0].mxu0
        %v2322 = vadd.f32 %v1078, %v2321
        %v2323 = vpop.f32.mrb[0].mxu0
        %2324 = vmatprep.mubr.f32.mxu0 0.0
        %2325 = vmatmul.mubr.f32.gmra.mrb[0].mxu0 %v2157
        %v2326 = vpop.f32.mrb[0].mxu0
        %v2327 = vadd.f32 %v1078, %v2326
        %v2328 = vpop.f32.mrb[0].mxu0
        %2329 = vmatprep.mubr.f32.mxu0 0.0
        %2330 = vmatmul.mubr.f32.gmra.mrb[0].mxu0 %v2160
        %v2331 = vpop.f32.mrb[0].mxu0
        %v2332 = vadd.f32 %v1078, %v2331
        %v2333 = vpop.f32.mrb[0].mxu0
        %2334 = vmatprep.mubr.f32.mxu0 0.0
        %2335 = vmatmul.mubr.f32.gmra.mrb[0].mxu0 %v2163
        %v2336 = vpop.f32.mrb[0].mxu0
        %v2337 = vadd.f32 %v1078, %v2336
        %v2338 = vpop.f32.mrb[0].mxu0
        %2339 = vmatprep.mubr.f32.mxu0 0.0
        %2340 = vmatmul.mubr.f32.gmra.mrb[0].mxu0 %v2166
        %v2341 = vpop.f32.mrb[0].mxu0
        %v2342 = vadd.f32 %v1078, %v2341
        %v2343 = vpop.f32.mrb[0].mxu0
        %2344 = vmatprep.mubr.f32.mxu0 0.0
        %2345 = vmatmul.mubr.f32.gmra.mrb[0].mxu0 %v2169
        %v2346 = vpop.f32.mrb[0].mxu0
        %v2347 = vadd.f32 %v1078, %v2346
        %v2348 = vpop.f32.mrb[0].mxu0
        %2349 = vmatprep.mubr.f32.mxu0 0.0
        %2350 = vmatmul.mubr.f32.gmra.mrb[0].mxu0 %v2172
        %v2351 = vpop.f32.mrb[0].mxu0
        %v2352 = vadd.f32 %v1078, %v2351
        %v2353 = vpop.f32.mrb[0].mxu0
        %2354 = vmatprep.mubr.f32.mxu0 0.0
        %2355 = vmatmul.mubr.f32.gmra.mrb[0].mxu0 %v2175
        %v2356 = vpop.f32.mrb[0].mxu0
        %v2357 = vadd.f32 %v1078, %v2356
        %v2358 = vpop.f32.mrb[0].mxu0
        %2359 = vmatprep.mubr.f32.mxu0 0.0
        %2360 = vmatmul.mubr.f32.gmra.mrb[0].mxu0 %v2178
        %v2361 = vpop.f32.mrb[0].mxu0
        %v2362 = vadd.f32 %v1078, %v2361
        %v2363 = vpop.f32.mrb[0].mxu0
        %2364 = vmatprep.mubr.f32.mxu0 0.0
        %2365 = vmatmul.mubr.f32.gmra.mrb[0].mxu0 %v2181
        %v2366 = vpop.f32.mrb[0].mxu0
        %v2367 = vadd.f32 %v1078, %v2366
        %v2368 = vpop.f32.mrb[0].mxu0
        %2369 = vmatprep.mubr.f32.mxu0 0.0
        %2370 = vmatmul.mubr.f32.gmra.mrb[0].mxu0 %v2184
        %v2371 = vpop.f32.mrb[0].mxu0
        %v2372 = vadd.f32 %v1078, %v2371
        %v2373 = vpop.f32.mrb[0].mxu0
        %2374 = vmatprep.mubr.f32.mxu0 0.0
        %2375 = vmatmul.mubr.f32.gmra.mrb[0].mxu0 %v2187
        %v2376 = vpop.f32.mrb[0].mxu0
        %v2377 = vadd.f32 %v1078, %v2376
        %v2378 = vpop.f32.mrb[0].mxu0
        %2379 = vmatprep.mubr.f32.mxu0 0.0
        %2380 = vmatmul.mubr.f32.gmra.mrb[0].mxu0 %v2190
        %v2381 = vpop.f32.mrb[0].mxu0
        %v2382 = vadd.f32 %v1078, %v2381
        %v2383 = vpop.f32.mrb[0].mxu0
        %2384 = vmatprep.mubr.f32.mxu0 0.0
        %2385 = vmatmul.mubr.f32.gmra.mrb[0].mxu0 %v2193
        %v2386 = vpop.f32.mrb[0].mxu0
        %v2387 = vadd.f32 %v1078, %v2386
        %v2388 = vpop.f32.mrb[0].mxu0
        %2389 = vmatprep.mubr.f32.mxu0 0.0
        %2390 = vmatmul.mubr.f32.gmra.mrb[0].mxu0 %v2196
        %v2391 = vpop.f32.mrb[0].mxu0
        %v2392 = vadd.f32 %v1078, %v2391
        %v2393 = vpop.f32.mrb[0].mxu0
        %2394 = vmatprep.mubr.f32.mxu0 0.0
        %2395 = vmatmul.mubr.f32.gmra.mrb[0].mxu0 %v2199
        %v2396 = vpop.f32.mrb[0].mxu0
        %v2397 = vadd.f32 %v1078, %v2396
        %v2398 = vpop.f32.mrb[0].mxu0
        %2399 = vmatprep.mubr.f32.mxu0 0.0
        %2400 = vmatmul.mubr.f32.gmra.mrb[0].mxu0 %v2202
        %v2401 = vpop.f32.mrb[0].mxu0
        %v2402 = vadd.f32 %v1078, %v2401
        %v2403 = vpop.f32.mrb[0].mxu0
        %2404 = vmatprep.mubr.f32.mxu0 0.0
        %2405 = vmatmul.mubr.f32.gmra.mrb[0].mxu0 %v2205
        %v2406 = vpop.f32.mrb[0].mxu0
        %v2407 = vadd.f32 %v1078, %v2406
        %v2408 = vpop.f32.mrb[0].mxu0
        %2409 = vmatprep.mubr.f32.mxu0 0.0
        %2410 = vmatmul.mubr.f32.gmra.mrb[0].mxu0 %v2208
        %v2411 = vpop.f32.mrb[0].mxu0
        %v2412 = vadd.f32 %v1078, %v2411
        %v2413 = vpop.f32.mrb[0].mxu0
        %2414 = vmatprep.mubr.f32.mxu0 0.0
        %2415 = vmatmul.mubr.f32.gmra.mrb[0].mxu0 %v2211
        %v2416 = vpop.f32.mrb[0].mxu0
        %v2417 = vadd.f32 %v1078, %v2416
        %v2418 = vpop.f32.mrb[0].mxu0
        %2419 = vmatprep.mubr.f32.mxu0 0.0
        %2420 = vmatmul.mubr.f32.gmra.mrb[0].mxu0 %v2214
        %v2421 = vpop.f32.mrb[0].mxu0
        %v2422 = vadd.f32 %v1078, %v2421
        %v2423 = vpop.f32.mrb[0].mxu0
        %2424 = vmatprep.mubr.f32.mxu0 0.0
        %2425 = vmatmul.mubr.f32.gmra.mrb[0].mxu0 %v2217
        %v2426 = vpop.f32.mrb[0].mxu0
        %v2427 = vadd.f32 %v1078, %v2426
        %v2428 = vpop.f32.mrb[0].mxu0
        %2429 = vmatprep.mubr.f32.mxu0 0.0
        %2430 = vmatmul.mubr.f32.gmra.mrb[0].mxu0 %v2220
        %v2431 = vpop.f32.mrb[0].mxu0
        %v2432 = vadd.f32 %v1078, %v2431
        %v2433 = vpop.f32.mrb[0].mxu0
        %2434 = vmatprep.mubr.f32.mxu0 0.0
        %2435 = vmatmul.mubr.f32.gmra.mrb[0].mxu0 %v2223
        %v2436 = vpop.f32.mrb[0].mxu0
        %v2437 = vadd.f32 %v1078, %v2436
        %v2438 = vpop.f32.mrb[0].mxu0
        %2439 = vmatprep.mubr.f32.mxu0 0.0
        %2440 = vmatmul.mubr.f32.gmra.mrb[0].mxu0 %v2226
        %v2441 = vpop.f32.mrb[0].mxu0
        %v2442 = vadd.f32 %v1078, %v2441
        %v2443 = vpop.f32.mrb[0].mxu0
        %2444 = vmatprep.mubr.f32.mxu0 0.0
        %2445 = vmatmul.mubr.f32.gmra.mrb[0].mxu0 %v2229
        %v2446 = vpop.f32.mrb[0].mxu0
        %v2447 = vadd.f32 %v1078, %v2446
        %v2448 = vpop.f32.mrb[0].mxu0
        %2449 = vmatprep.mubr.f32.mxu0 0.0
        %2450 = vmatmul.mubr.f32.gmra.mrb[0].mxu0 %v2232
        %v2451 = vpop.f32.mrb[0].mxu0
        %v2452 = vadd.f32 %v1078, %v2451
        %v2453 = vpop.f32.mrb[0].mxu0
        %2454 = vmatprep.mubr.f32.mxu0 0.0
        %2455 = vmatmul.mubr.f32.gmra.mrb[0].mxu0 %v2235
        %v2456 = vpop.f32.mrb[0].mxu0
        %v2457 = vadd.f32 %v1078, %v2456
        %v2458 = vpop.f32.mrb[0].mxu0
        %2459 = vmatprep.mubr.f32.mxu0 0.0
        %2460 = vmatmul.mubr.f32.gmra.mrb[0].mxu0 %v2238
        %v2461 = vpop.f32.mrb[0].mxu0
        %v2462 = vadd.f32 %v1078, %v2461
        %v2463 = vpop.f32.mrb[0].mxu0
        %2464 = vdwg.mxu0
        %v2465 = vmax.f32 %v2307, 0.0
        %v2466 = vmax.f32 %v2312, 0.0
        %v2467 = vmax.f32 %v2317, 0.0
        %v2468 = vmax.f32 %v2322, 0.0
        %v2469 = vmax.f32 %v2327, 0.0
        %v2470 = vmax.f32 %v2332, 0.0
        %v2471 = vmax.f32 %v2337, 0.0
        %v2472 = vmax.f32 %v2342, 0.0
        %v2473 = vmax.f32 %v2347, 0.0
        %v2474 = vmax.f32 %v2352, 0.0
        %v2475 = vmax.f32 %v2357, 0.0
        %v2476 = vmax.f32 %v2362, 0.0
        %v2477 = vmax.f32 %v2367, 0.0
        %v2478 = vmax.f32 %v2372, 0.0
        %v2479 = vmax.f32 %v2377, 0.0
        %v2480 = vmax.f32 %v2382, 0.0
        %v2481 = vmax.f32 %v2387, 0.0
        %v2482 = vmax.f32 %v2392, 0.0
        %v2483 = vmax.f32 %v2397, 0.0
        %v2484 = vmax.f32 %v2402, 0.0
        %v2485 = vmax.f32 %v2407, 0.0
        %v2486 = vmax.f32 %v2412, 0.0
        %v2487 = vmax.f32 %v2417, 0.0
        %v2488 = vmax.f32 %v2422, 0.0
        %v2489 = vmax.f32 %v2427, 0.0
        %v2490 = vmax.f32 %v2432, 0.0
        %v2491 = vmax.f32 %v2437, 0.0
        %v2492 = vmax.f32 %v2442, 0.0
        %v2493 = vmax.f32 %v2447, 0.0
        %v2494 = vmax.f32 %v2452, 0.0
        %v2495 = vmax.f32 %v2457, 0.0
        %v2496 = vmax.f32 %v2462, 0.0
        %v2497 = vadd.f32 %v2465, %v2466
        %v2498 = vadd.f32 %v2497, %v2467
        %v2499 = vadd.f32 %v2498, %v2468
        %v2500 = vadd.f32 %v2499, %v2469
        %v2501 = vadd.f32 %v2500, %v2470
        %v2502 = vadd.f32 %v2501, %v2471
        %v2503 = vadd.f32 %v2502, %v2472
        %v2504 = vadd.f32 %v2503, %v2473
        %v2505 = vadd.f32 %v2504, %v2474
        %v2506 = vadd.f32 %v2505, %v2475
        %v2507 = vadd.f32 %v2506, %v2476
        %v2508 = vadd.f32 %v2507, %v2477
        %v2509 = vadd.f32 %v2508, %v2478
        %v2510 = vadd.f32 %v2509, %v2479
        %v2511 = vadd.f32 %v2510, %v2480
        %v2512 = vadd.f32 %v2511, %v2481
        %v2513 = vadd.f32 %v2512, %v2482
        %v2514 = vadd.f32 %v2513, %v2483
        %v2515 = vadd.f32 %v2514, %v2484
        %v2516 = vadd.f32 %v2515, %v2485
        %v2517 = vadd.f32 %v2516, %v2486
        %v2518 = vadd.f32 %v2517, %v2487
        %v2519 = vadd.f32 %v2518, %v2488
        %v2520 = vadd.f32 %v2519, %v2489
        %v2521 = vadd.f32 %v2520, %v2490
        %v2522 = vadd.f32 %v2521, %v2491
        %v2523 = vadd.f32 %v2522, %v2492
        %v2524 = vadd.f32 %v2523, %v2493
        %v2525 = vadd.f32 %v2524, %v2494
        %v2526 = vadd.f32 %v2525, %v2495
        %v2527 = vadd.f32 %v2526, %v2496
        %v2528 = vrot.slane %v2527, 4
        %v2529 = vadd.f32 %v2527, %v2528
        %v2530 = vrot.slane %v2529, 2
        %v2531 = vadd.f32 %v2529, %v2530
        %v2532 = vrot.slane %v2531, 1
        %v2533 = vadd.f32 %v2531, %v2532
        %vm2534 = vcmask 1040384
        %v2535 = vsel %vm2534, %v1470, %v2533
        %p2536 = scmp.eq.s32.totalorder %s28, 0
        // Predicated region
        $region53: #{tpu_custom_call.1} parent=51 // pred_check
          %p2537 = pneg %p2536
        $region54: #{tpu_custom_call.1} parent=51 // pred_check_branch
          %2539 = sbr.rel (%p2537) target = $region56
        $region55: #{tpu_custom_call.1} parent=51 // pred_region
          %2540 = vst [vmem:[#allocation2] sm:$0x3] %v2535
        $region56: #{tpu_custom_call.1} parent=51 // pred_fallthru
          _
        %p2541 = scmp.ne.s32.totalorder %s28, 0
        // Predicated region
        $region57: #{tpu_custom_call.1} parent=51 // pred_check
          %p2542 = pneg %p2541
        $region58: #{tpu_custom_call.1} parent=51 // pred_check_branch
          %2544 = sbr.rel (%p2542) target = $region60
        $region59: #{tpu_custom_call.1} parent=51 // pred_region
          %v2545 = vld [vmem:[#allocation2] sm:$0x3]
          %v2546 = vadd.f32 %v2545, %v2535
          %2547 = vst [vmem:[#allocation2] sm:$0x3] %v2546
        $region60: #{tpu_custom_call.1} parent=51 // pred_fallthru
          _
        // Predicated region
        $region61: #{tpu_custom_call.1} parent=51 // pred_check
          %p2548 = pneg %p2536
        $region62: #{tpu_custom_call.1} parent=51 // pred_check_branch
          %2550 = sbr.rel (%p2548) target = $region64
        $region63: #{tpu_custom_call.1} parent=51 // pred_region
          %v2551 = vld [vmem:[#allocation2] sm:$0x3]
          %v2552 = vmul.f32 %v2551, 0.00390625
          %p2553 = scmp.eq.s32.totalorder %s27, 0
          // Predicated region
          $region65: #{tpu_custom_call.1} parent=63 // pred_check
            %p2554 = pneg %p2553
          $region66: #{tpu_custom_call.1} parent=63 // pred_check_branch
            %2556 = sbr.rel (%p2554) target = $region68
          $region67: #{tpu_custom_call.1} parent=63 // pred_region
            %2557 = vst [vmem:[#allocation3] sm:$0x3] %v2552
          $region68: #{tpu_custom_call.1} parent=63 // pred_fallthru
            _
          %p2558 = scmp.eq.s32.totalorder %s27, 1
          // Predicated region
          $region69: #{tpu_custom_call.1} parent=63 // pred_check
            %p2559 = pneg %p2558
          $region70: #{tpu_custom_call.1} parent=63 // pred_check_branch
            %2561 = sbr.rel (%p2559) target = $region72
          $region71: #{tpu_custom_call.1} parent=63 // pred_region
            %2562 = vst [vmem:[#allocation3 + $0x2] sm:$0x3] %v2552
          $region72: #{tpu_custom_call.1} parent=63 // pred_fallthru
            _
        $region64: #{tpu_custom_call.1} parent=51 // pred_fallthru
          _
        %p2563 = scmp.eq.s32.totalorder %s27, 1
        %p2564 = pnand %p2563, %p2536
        %p2565 = pneg %p2564
        // Predicated region
        $region73: #{tpu_custom_call.1} parent=51 // pred_check
          _
        $region74: #{tpu_custom_call.1} parent=51 // pred_check_branch
          %2567 = sbr.rel (%p2564) target = $region76
        $region75: #{tpu_custom_call.1} parent=51 // pred_region
          %v2568 = vld [vmem:[#allocation3] sm:$0xf]
          %vm2569 = vcmask 1043456
          %v2570 = vsel %vm2569, %v2568, 0.0
          %v2571 = vrot.slane %v2570, 4
          %v2572 = vadd.f32 %v2570, %v2571
          %v2573 = vrot.slane %v2572, 2
          %v2574 = vadd.f32 %v2572, %v2573
          %v2575 = vrot.slane %v2574, 1
          %v2576 = vadd.f32 %v2574, %v2575
          %v2577 = vrcp.pop 4.0
          %v2578 = vmul.f32 %v2576, %v2577
          %v2579 = vsub.f32 %v2568, %v2578
          %v2580 = vmul.f32 %v2579, %v2579
          %v2581 = vsel %vm2569, %v2580, 0.0
          %v2582 = vrot.slane %v2581, 4
          %v2583 = vadd.f32 %v2581, %v2582
          %v2584 = vrot.slane %v2583, 2
          %v2585 = vadd.f32 %v2583, %v2584
          %v2586 = vrot.slane %v2585, 1
          %v2587 = vadd.f32 %v2585, %v2586
          %v2588 = vmul.f32 %v2587, %v2577
          %v2589 = vadd.f32 %v2588, 1e-05
          %v2590 = vrsqrt.pop %v2589
          %v2591 = vmul.f32 %v2579, %v2590
          %v2592 = vld [vmem:[%s5] sm:$0x1]
          %v2594 = vlaneseq
          %v2595 = vshrl.u32 %v2594, 7
          %v2596 = vsub.s32 0, %v2595
          %v2597 = vrot.slane %v2592, %v2596
          %v2599 = vmul.f32 %v2591, %v2597
          %v2600 = vld [vmem:[%s6] sm:$0x1]
          %v2602 = vlaneseq
          %v2603 = vshrl.u32 %v2602, 7
          %v2604 = vsub.s32 0, %v2603
          %v2605 = vrot.slane %v2600, %v2604
          %v2607 = vadd.f32 %v2599, %v2605
          %v2608 = vld [vmem:[%s7] sm:$0xff]
          %v2609 = vld [vmem:[%s7 + $0x8] sm:$0xff]
          %v2610 = vld [vmem:[%s7 + $0x10] sm:$0xff]
          %v2611 = vld [vmem:[%s7 + $0x18] sm:$0xff]
          %v2612 = vld [vmem:[%s7 + $0x20] sm:$0xff]
          %v2613 = vld [vmem:[%s7 + $0x28] sm:$0xff]
          %v2614 = vld [vmem:[%s7 + $0x30] sm:$0xff]
          %v2615 = vld [vmem:[%s7 + $0x38] sm:$0xff]
          %v2616 = vld [vmem:[%s7 + $0x40] sm:$0xff]
          %v2617 = vld [vmem:[%s7 + $0x48] sm:$0xff]
          %v2618 = vld [vmem:[%s7 + $0x50] sm:$0xff]
          %v2619 = vld [vmem:[%s7 + $0x58] sm:$0xff]
          %v2620 = vld [vmem:[%s7 + $0x60] sm:$0xff]
          %v2621 = vld [vmem:[%s7 + $0x68] sm:$0xff]
          %v2622 = vld [vmem:[%s7 + $0x70] sm:$0xff]
          %v2623 = vld [vmem:[%s7 + $0x78] sm:$0xff]
          %2624 = vmatprep.subr.mxu0 0.0
          %2625 = vmatpush1.msra.mxu0 %v2608
          %2626 = vmatprep.subr.mxu0 0.0
          %2627 = vmatpush1.msra.mxu0 %v2609
          %2628 = vmatprep.subr.mxu0 0.0
          %2629 = vmatpush1.msra.mxu0 %v2610
          %2630 = vmatprep.subr.mxu0 0.0
          %2631 = vmatpush1.msra.mxu0 %v2611
          %2632 = vmatprep.subr.mxu0 0.0
          %2633 = vmatpush1.msra.mxu0 %v2612
          %2634 = vmatprep.subr.mxu0 0.0
          %2635 = vmatpush1.msra.mxu0 %v2613
          %2636 = vmatprep.subr.mxu0 0.0
          %2637 = vmatpush1.msra.mxu0 %v2614
          %2638 = vmatprep.subr.mxu0 0.0
          %2639 = vmatpush1.msra.mxu0 %v2615
          %2640 = vmatprep.subr.mxu0 0.0
          %2641 = vmatpush1.msra.mxu0 %v2616
          %2642 = vmatprep.subr.mxu0 0.0
          %2643 = vmatpush1.msra.mxu0 %v2617
          %2644 = vmatprep.subr.mxu0 0.0
          %2645 = vmatpush1.msra.mxu0 %v2618
          %2646 = vmatprep.subr.mxu0 0.0
          %2647 = vmatpush1.msra.mxu0 %v2619
          %2648 = vmatprep.subr.mxu0 0.0
          %2649 = vmatpush1.msra.mxu0 %v2620
          %2650 = vmatprep.subr.mxu0 0.0
          %2651 = vmatpush1.msra.mxu0 %v2621
          %2652 = vmatprep.subr.mxu0 0.0
          %2653 = vmatpush1.msra.mxu0 %v2622
          %2654 = vmatprep.subr.mxu0 0.0
          %2655 = vmatpush1.msra.mxu0 %v2623
          %2656 = vmatprep.subr.mxu0 0.0
          %2657 = vmatpush1.msra.mxu0 0.0
          %2658 = vmatprep.subr.mxu0 0.0
          %2659 = vmatpush1.msra.mxu0 0.0
          %2660 = vmatprep.subr.mxu0 0.0
          %2661 = vmatpush1.msra.mxu0 0.0
          %2662 = vmatprep.subr.mxu0 0.0
          %2663 = vmatpush1.msra.mxu0 0.0
          %2664 = vmatprep.subr.mxu0 0.0
          %2665 = vmatpush1.msra.mxu0 0.0
          %2666 = vmatprep.subr.mxu0 0.0
          %2667 = vmatpush1.msra.mxu0 0.0
          %2668 = vmatprep.subr.mxu0 0.0
          %2669 = vmatpush1.msra.mxu0 0.0
          %2670 = vmatprep.subr.mxu0 0.0
          %2671 = vmatpush1.msra.mxu0 0.0
          %2672 = vmatprep.subr.mxu0 0.0
          %2673 = vmatpush1.msra.mxu0 0.0
          %2674 = vmatprep.subr.mxu0 0.0
          %2675 = vmatpush1.msra.mxu0 0.0
          %2676 = vmatprep.subr.mxu0 0.0
          %2677 = vmatpush1.msra.mxu0 0.0
          %2678 = vmatprep.subr.mxu0 0.0
          %2679 = vmatpush1.msra.mxu0 0.0
          %2680 = vmatprep.subr.mxu0 0.0
          %2681 = vmatpush1.msra.mxu0 0.0
          %2682 = vmatprep.subr.mxu0 0.0
          %2683 = vmatpush1.msra.mxu0 0.0
          %2684 = vmatprep.subr.mxu0 0.0
          %2685 = vmatpush1.msra.mxu0 0.0
          %2686 = vmatprep.subr.mxu0 0.0
          %2687 = vmatpush1.msra.mxu0 0.0
          %2688 = vmatprep.mubr.f32.mxu0 0.0
          %2689 = vmatmul.mubr.f32.gmra.mrb[0].mxu0 %v2607
          %v2690 = vpop.f32.mrb[0].mxu0
          %v2691 = vadd.f32 0.0, %v2690
          %v2692 = vpop.f32.mrb[0].mxu0
          %2693 = vdwg.mxu0
          %vm2694 = vcmask 125952
          %2695 = vst.msk [vmem:[#allocation5] sm:$0xf] %vm2694, %v2691
        $region76: #{tpu_custom_call.1} parent=51 // pred_fallthru
          _
        // Predicated region
        $region77: #{tpu_custom_call.1} parent=51 // pred_check
          %p2696 = pneg %p233
        $region78: #{tpu_custom_call.1} parent=51 // pred_check_branch
          %2698 = sbr.rel (%p2696) target = $region80
        $region79: #{tpu_custom_call.1} parent=51 // pred_region
          %s2700 = ssub.s32 64, 64
          %2701 = vsyncadd [#allocation4], %s2700
          %s2703 = sshll.u32 [#allocation3], 4
          %s2704 = int_to_ptr.vmem [resolvable:$true] %s2703
          %2706 = dma.vmem_to_hbm [thread:$0]  %s2704, 64, %s8, [#allocation4]
        $region80: #{tpu_custom_call.1} parent=51 // pred_fallthru
          _
        // Predicated region
        $region81: #{tpu_custom_call.1} parent=51 // pred_check
          %p2707 = pneg %p254
        $region82: #{tpu_custom_call.1} parent=51 // pred_check_branch
          %2709 = sbr.rel (%p2707) target = $region84
        $region83: #{tpu_custom_call.1} parent=51 // pred_region
          %s2711 = ssub.s32 64, 64
          %2712 = vsyncadd [#allocation6], %s2711
          %s2714 = sshll.u32 [#allocation5], 4
          %s2715 = int_to_ptr.vmem [resolvable:$true] %s2714
          %2717 = dma.vmem_to_hbm [thread:$0]  %s2715, 64, %s9, [#allocation6]
        $region84: #{tpu_custom_call.1} parent=51 // pred_fallthru
          _
        // Predicated region
        $region85: #{tpu_custom_call.1} parent=51 // pred_check
          %p2718 = pneg %p233
        $region86: #{tpu_custom_call.1} parent=51 // pred_check_branch
          %2720 = sbr.rel (%p2718) target = $region88
        $region87: #{tpu_custom_call.1} parent=51 // pred_region
          %2721 = dma.done [#allocation4], 64
        $region88: #{tpu_custom_call.1} parent=51 // pred_fallthru
          _
        // Predicated region
        $region89: #{tpu_custom_call.1} parent=51 // pred_check
          %p2722 = pneg %p254
        $region90: #{tpu_custom_call.1} parent=51 // pred_check_branch
          %2724 = sbr.rel (%p2722) target = $region92
        $region91: #{tpu_custom_call.1} parent=51 // pred_region
          %2725 = dma.done [#allocation6], 64
        $region92: #{tpu_custom_call.1} parent=51 // pred_fallthru
          _
      $region52: #{tpu_custom_call.1} parent=5 // pred_fallthru
        _
      %p2726 = scmp.le.s32.totalorder 2, %s18
      // Predicated region
      $region93: #{tpu_custom_call.1} parent=5 // pred_check
        %p2727 = pneg %p2726
      $region94: #{tpu_custom_call.1} parent=5 // pred_check_branch
        %2729 = sbr.rel (%p2727) target = $region96
      $region95: #{tpu_custom_call.1} parent=5 // pred_region
        %s2730 = ssub.s32 %s18, 2
      $region96: #{tpu_custom_call.1} parent=5 // pred_fallthru
        _
    $region6: #{tpu_custom_call.1} parent=1 // loop_footer
      %s22 = sadd.s32 1, %s18
    $region7: #{tpu_custom_call.1} parent=1 // loop_footer_branch
      %17 = sbr.rel target = $region3
    $region8: #{tpu_custom_call.1} parent=1 // loop_exit
      _
    %2731 = vsyncpa [#allocation4], 1
    %s2732 = scalar_lea.sflag [#allocation4], 1
    %2733 = vsyncpa %s2732, 1
    %2734 = vsyncpa [#allocation6], 1

</llo_original>
